<compile_context>
chip_gen: v7x
topology: tpu7x:2x2x1
jax: 0.10.0
libtpu: 0.0.40
codegen_flags: <defaults>
</compile_context>

<pallas_src>
import functools

import jax
import jax.numpy as jnp
from jax.experimental import pallas as pl
from jax.experimental.pallas import tpu as pltpu


_COMPILER_PARAMS = pltpu.CompilerParams(dimension_semantics=("arbitrary",))


# ----------------------------- Pallas kernels ------------------------------

def _conv_relu_kernel(w_ref, p_ref, b_ref, o_ref):
    # w: (O, K)  patches: (K, M)  bias: (O, 1)  ->  o: (O, M), M lane-dense.
    acc = jnp.dot(w_ref[...], p_ref[...], preferred_element_type=jnp.float32)
    acc = acc + b_ref[...]
    o_ref[...] = jnp.maximum(acc, 0.0)


def conv_mm_bias_relu(wmat, patches, bias2d):
    """relu(wmat @ patches + bias). wmat:(O,K), patches:(K,M), bias:(O,1)."""
    O, K = wmat.shape
    K2, M = patches.shape
    assert K == K2
    return pl.pallas_call(
        _conv_relu_kernel,
        out_shape=jax.ShapeDtypeStruct((O, M), jnp.float32),
        grid=(1,),
        in_specs=[
            pl.BlockSpec((O, K), lambda i: (0, 0)),
            pl.BlockSpec((K, M), lambda i: (0, 0)),
            pl.BlockSpec((O, 1), lambda i: (0, 0)),
        ],
        out_specs=pl.BlockSpec((O, M), lambda i: (0, 0)),
        compiler_params=_COMPILER_PARAMS,
    )(wmat, patches, bias2d)


def _fc_stack_kernel(x_ref, w1_ref, b1_ref, w2_ref, b2_ref, w3_ref, b3_ref,
                     o_ref):
    # Fused fc1+ReLU -> fc2+ReLU -> fc3; intermediates never leave the kernel.
    h = jnp.dot(x_ref[...], w1_ref[...],
                preferred_element_type=jnp.float32) + b1_ref[...]
    h = jnp.maximum(h, 0.0)
    h = jnp.dot(h, w2_ref[...],
                preferred_element_type=jnp.float32) + b2_ref[...]
    h = jnp.maximum(h, 0.0)
    o_ref[...] = jnp.dot(h, w3_ref[...],
                         preferred_element_type=jnp.float32) + b3_ref[...]


def fc_stack(x, w1, b1, w2, b2, w3, b3):
    """relu(relu(x@w1+b1)@w2+b2)@w3+b3 in a single Pallas kernel."""
    N = x.shape[0]
    n_out = w3.shape[1]
    operands = (x, w1, b1, w2, b2, w3, b3)
    return pl.pallas_call(
        _fc_stack_kernel,
        out_shape=jax.ShapeDtypeStruct((N, n_out), jnp.float32),
        grid=(1,),
        in_specs=[pl.BlockSpec(t.shape, lambda i: (0, 0)) for t in operands],
        out_specs=pl.BlockSpec((N, n_out), lambda i: (0, 0)),
        compiler_params=_COMPILER_PARAMS,
    )(*operands)


# --------------------------- jitted forward glue ----------------------------

def _im2col_cnhw(x, k):
    """x: (C, N, H, W) -> patches (C*k*k, N*Ho*Wo).

    Row order c*k*k + kh*k + kw matches torch weight.reshape(O, C*k*k);
    column order n*Ho*Wo + h*Wo + w.  Runs as fused XLA ops under jit.
    """
    C, N, H, W = x.shape
    Ho, Wo = H - k + 1, W - k + 1
    cols = jnp.stack(
        [x[:, :, i:i + Ho, j:j + Wo] for i in range(k) for j in range(k)],
        axis=1,
    )                                              # (C, k*k, N, Ho, Wo)
    return cols.reshape(C * k * k, N * Ho * Wo)


def _pool2(y, c, n, h, w):
    """y: (c, n*h*w) flat conv output -> 2x2/2 max pool -> (c, n, h//2, w//2)."""
    return y.reshape(c, n, h // 2, 2, w // 2, 2).max(axis=(3, 5))


@functools.partial(jax.jit, static_argnames=("kernel",))
def lenet_forward(params, x, *, kernel):
    k = kernel
    N, C, H, W = x.shape

    # ---- conv1 + ReLU (Pallas) ----
    xc = jnp.transpose(x, (1, 0, 2, 3))            # (C, N, H, W)
    Ho, Wo = H - k + 1, W - k + 1
    p1 = _im2col_cnhw(xc, k)                       # (C*k*k, N*Ho*Wo)
    y1 = conv_mm_bias_relu(params["conv1_wm"], p1, params["conv1_b"])
    # ---- 2x2 max pool (fused XLA under jit) ----
    # TODO(synk): F.max_pool2d has no dedicated Pallas kernel here; it stays a
    # fused XLA reshape+max inside the same jit (~12 KB of data).
    y1 = _pool2(y1, 6, N, Ho, Wo)                  # (6, N, Ho/2, Wo/2)

    # ---- conv2 + ReLU (Pallas) ----
    H2, W2 = Ho // 2, Wo // 2
    Ho2, Wo2 = H2 - k + 1, W2 - k + 1
    p2 = _im2col_cnhw(y1, k)                       # (6*k*k, N*Ho2*Wo2)
    y2 = conv_mm_bias_relu(params["conv2_wm"], p2, params["conv2_b"])
    y2 = _pool2(y2, 16, N, Ho2, Wo2)               # (16, N, 5, 5)

    # ---- flatten in torch NCHW .view order ----
    feat = jnp.transpose(y2, (1, 0, 2, 3)).reshape(N, -1)   # (N, 400)

    # ---- fused fc1/fc2/fc3 (single Pallas kernel) ----
    return fc_stack(feat,
                    params["fc1_wT"], params["fc1_b"],
                    params["fc2_wT"], params["fc2_b"],
                    params["fc3_wT"], params["fc3_b"])


# ------------------------------- init --------------------------------------

def init_params(key, in_ch, kernel):
    """PyTorch-default-style U(-1/sqrt(fan_in), +1/sqrt(fan_in)) init,
    stored directly in kernel-friendly layouts (no per-forward transposes)."""
    ks = jax.random.split(key, 10)

    def unif(k, shape, fan_in):
        bound = 1.0 / float(fan_in) ** 0.5
        return jax.random.uniform(k, shape, jnp.float32, -bound, bound)

    fan_c1 = in_ch * kernel * kernel
    fan_c2 = 6 * kernel * kernel

    p = {}
    p["conv1_wm"] = unif(ks[0], (6, in_ch, kernel, kernel), fan_c1).reshape(6, -1)
    p["conv1_b"] = unif(ks[1], (6,), fan_c1).reshape(6, 1)
    p["conv2_wm"] = unif(ks[2], (16, 6, kernel, kernel), fan_c2).reshape(16, -1)
    p["conv2_b"] = unif(ks[3], (16,), fan_c2).reshape(16, 1)
    p["fc1_wT"] = unif(ks[4], (120, 400), 400).T       # (in, out)
    p["fc1_b"] = unif(ks[5], (120,), 400).reshape(1, 120)
    p["fc2_wT"] = unif(ks[6], (84, 120), 120).T
    p["fc2_b"] = unif(ks[7], (84,), 120).reshape(1, 84)
    p["fc3_wT"] = unif(ks[8], (10, 84), 84).T
    p["fc3_b"] = unif(ks[9], (10,), 84).reshape(1, 10)
    return p


if __name__ == "__main__":
    # lenet(input=1, kernel=5) requires 32x32 spatial input so the flattened
    # feature count equals 5*5*16 = 400 (hard-coded in fc1).
    in_ch, kernel = 1, 5
    key = jax.random.PRNGKey(0)
    k_params, k_x = jax.random.split(key)
    params = init_params(k_params, in_ch, kernel)
    x = jax.random.normal(k_x, (2, in_ch, 32, 32), dtype=jnp.float32)

    out = lenet_forward(params, x, kernel=kernel)
    out = jax.block_until_ready(out)
    assert out.shape == (2, 10), out.shape
    print("KERNEL_OK")
</pallas_src>

<mosaic_0001>
module attributes {stable_mosaic.version = 11 : i64} {
  func.func @_conv_relu_kernel(%arg0: i32, %arg1: memref<6x25xf32, #tpu.memory_space<vmem>>, %arg2: memref<25x1568xf32, #tpu.memory_space<vmem>>, %arg3: memref<6x1xf32, #tpu.memory_space<vmem>>, %arg4: memref<6x1568xf32, #tpu.memory_space<vmem>>) attributes {dimension_semantics = [#tpu.dimension_semantics<arbitrary>], iteration_bounds = array<i64: 1>, scalar_prefetch = 0 : i64, scratch_operands = 0 : i64, tpu.core_type = #tpu.core_type<tc>, window_params = [{pipeline_mode = #tpu.pipeline_mode<synchronous>, transform_indices = @transform_0, window_bounds = array<i64: 6, 25>}, {pipeline_mode = #tpu.pipeline_mode<synchronous>, transform_indices = @transform_1, window_bounds = array<i64: 25, 1568>}, {pipeline_mode = #tpu.pipeline_mode<synchronous>, transform_indices = @transform_2, window_bounds = array<i64: 6, 1>}, {pipeline_mode = #tpu.pipeline_mode<synchronous>, transform_indices = @transform_3, window_bounds = array<i64: 6, 1568>}]} {
    %c0 = arith.constant 0 : index
    %c0_0 = arith.constant 0 : index
    %0 = vector.load %arg1[%c0, %c0_0] : memref<6x25xf32, #tpu.memory_space<vmem>>, vector<6x25xf32>
    %c0_1 = arith.constant 0 : index
    %c0_2 = arith.constant 0 : index
    %1 = vector.load %arg2[%c0_1, %c0_2] : memref<25x1568xf32, #tpu.memory_space<vmem>>, vector<25x1568xf32>
    %cst = arith.constant dense<0.000000e+00> : vector<6x1568xf32>
    %2 = tpu.matmul %0, %1, %cst {dimension_numbers = #tpu.dot_dimension_numbers<[1], [0], [0], [1], [0, 0, 1, 1], [], []>} : vector<6x25xf32>, vector<25x1568xf32>, vector<6x1568xf32> -> vector<6x1568xf32>
    %c0_3 = arith.constant 0 : index
    %c0_4 = arith.constant 0 : index
    %3 = vector.load %arg3[%c0_3, %c0_4] : memref<6x1xf32, #tpu.memory_space<vmem>>, vector<6x1xf32>
    %4 = vector.broadcast %3 : vector<6x1xf32> to vector<6x1568xf32>
    %5 = arith.addf %2, %4 : vector<6x1568xf32>
    %cst_5 = arith.constant 0.000000e+00 : f32
    %6 = vector.broadcast %cst_5 : f32 to vector<6x1568xf32>
    %7 = arith.maximumf %5, %6 : vector<6x1568xf32>
    %c0_6 = arith.constant 0 : index
    %c0_7 = arith.constant 0 : index
    %8 = vector.load %arg4[%c0_6, %c0_7] : memref<6x1568xf32, #tpu.memory_space<vmem>>, vector<6x1568xf32>
    tpu.vector_store %arg4[%c0_6, %c0_7], %7 {strides = array<i32>} : memref<6x1568xf32, #tpu.memory_space<vmem>>, vector<6x1568xf32>,
    return
  }
  func.func @transform_0(%arg0: i32) -> (i32, i32) {
    %c0_i32 = arith.constant 0 : i32
    %c0_i32_0 = arith.constant 0 : i32
    %c0_i32_1 = arith.constant 0 : i32
    return %c0_i32, %c0_i32_0 : i32, i32
  }
  func.func @transform_1(%arg0: i32) -> (i32, i32) {
    %c0_i32 = arith.constant 0 : i32
    %c0_i32_0 = arith.constant 0 : i32
    %c0_i32_1 = arith.constant 0 : i32
    return %c0_i32, %c0_i32_0 : i32, i32
  }
  func.func @transform_2(%arg0: i32) -> (i32, i32) {
    %c0_i32 = arith.constant 0 : i32
    %c0_i32_0 = arith.constant 0 : i32
    %c0_i32_1 = arith.constant 0 : i32
    return %c0_i32, %c0_i32_0 : i32, i32
  }
  func.func @transform_3(%arg0: i32) -> (i32, i32) {
    %c0_i32 = arith.constant 0 : i32
    %c0_i32_0 = arith.constant 0 : i32
    %c0_i32_1 = arith.constant 0 : i32
    return %c0_i32, %c0_i32_0 : i32, i32
  }
}

module attributes {stable_mosaic.version = 11 : i64} {
  func.func @_conv_relu_kernel(%arg0: i32, %arg1: memref<16x150xf32, #tpu.memory_space<vmem>>, %arg2: memref<150x200xf32, #tpu.memory_space<vmem>>, %arg3: memref<16x1xf32, #tpu.memory_space<vmem>>, %arg4: memref<16x200xf32, #tpu.memory_space<vmem>>) attributes {dimension_semantics = [#tpu.dimension_semantics<arbitrary>], iteration_bounds = array<i64: 1>, scalar_prefetch = 0 : i64, scratch_operands = 0 : i64, tpu.core_type = #tpu.core_type<tc>, window_params = [{pipeline_mode = #tpu.pipeline_mode<synchronous>, transform_indices = @transform_0, window_bounds = array<i64: 16, 150>}, {pipeline_mode = #tpu.pipeline_mode<synchronous>, transform_indices = @transform_1, window_bounds = array<i64: 150, 200>}, {pipeline_mode = #tpu.pipeline_mode<synchronous>, transform_indices = @transform_2, window_bounds = array<i64: 16, 1>}, {pipeline_mode = #tpu.pipeline_mode<synchronous>, transform_indices = @transform_3, window_bounds = array<i64: 16, 200>}]} {
    %c0 = arith.constant 0 : index
    %c0_0 = arith.constant 0 : index
    %0 = vector.load %arg1[%c0, %c0_0] : memref<16x150xf32, #tpu.memory_space<vmem>>, vector<16x150xf32>
    %c0_1 = arith.constant 0 : index
    %c0_2 = arith.constant 0 : index
    %1 = vector.load %arg2[%c0_1, %c0_2] : memref<150x200xf32, #tpu.memory_space<vmem>>, vector<150x200xf32>
    %cst = arith.constant dense<0.000000e+00> : vector<16x200xf32>
    %2 = tpu.matmul %0, %1, %cst {dimension_numbers = #tpu.dot_dimension_numbers<[1], [0], [0], [1], [0, 0, 1, 1], [], []>} : vector<16x150xf32>, vector<150x200xf32>, vector<16x200xf32> -> vector<16x200xf32>
    %c0_3 = arith.constant 0 : index
    %c0_4 = arith.constant 0 : index
    %3 = vector.load %arg3[%c0_3, %c0_4] : memref<16x1xf32, #tpu.memory_space<vmem>>, vector<16x1xf32>
    %4 = vector.broadcast %3 : vector<16x1xf32> to vector<16x200xf32>
    %5 = arith.addf %2, %4 : vector<16x200xf32>
    %cst_5 = arith.constant 0.000000e+00 : f32
    %6 = vector.broadcast %cst_5 : f32 to vector<16x200xf32>
    %7 = arith.maximumf %5, %6 : vector<16x200xf32>
    %c0_6 = arith.constant 0 : index
    %c0_7 = arith.constant 0 : index
    %8 = vector.load %arg4[%c0_6, %c0_7] : memref<16x200xf32, #tpu.memory_space<vmem>>, vector<16x200xf32>
    tpu.vector_store %arg4[%c0_6, %c0_7], %7 {strides = array<i32>} : memref<16x200xf32, #tpu.memory_space<vmem>>, vector<16x200xf32>,
    return
  }
  func.func @transform_0(%arg0: i32) -> (i32, i32) {
    %c0_i32 = arith.constant 0 : i32
    %c0_i32_0 = arith.constant 0 : i32
    %c0_i32_1 = arith.constant 0 : i32
    return %c0_i32, %c0_i32_0 : i32, i32
  }
  func.func @transform_1(%arg0: i32) -> (i32, i32) {
    %c0_i32 = arith.constant 0 : i32
    %c0_i32_0 = arith.constant 0 : i32
    %c0_i32_1 = arith.constant 0 : i32
    return %c0_i32, %c0_i32_0 : i32, i32
  }
  func.func @transform_2(%arg0: i32) -> (i32, i32) {
    %c0_i32 = arith.constant 0 : i32
    %c0_i32_0 = arith.constant 0 : i32
    %c0_i32_1 = arith.constant 0 : i32
    return %c0_i32, %c0_i32_0 : i32, i32
  }
  func.func @transform_3(%arg0: i32) -> (i32, i32) {
    %c0_i32 = arith.constant 0 : i32
    %c0_i32_0 = arith.constant 0 : i32
    %c0_i32_1 = arith.constant 0 : i32
    return %c0_i32, %c0_i32_0 : i32, i32
  }
}

module attributes {stable_mosaic.version = 11 : i64} {
  func.func @_fc_stack_kernel(%arg0: i32, %arg1: memref<2x400xf32, #tpu.memory_space<vmem>>, %arg2: memref<400x120xf32, #tpu.memory_space<vmem>>, %arg3: memref<1x120xf32, #tpu.memory_space<vmem>>, %arg4: memref<120x84xf32, #tpu.memory_space<vmem>>, %arg5: memref<1x84xf32, #tpu.memory_space<vmem>>, %arg6: memref<84x10xf32, #tpu.memory_space<vmem>>, %arg7: memref<1x10xf32, #tpu.memory_space<vmem>>, %arg8: memref<2x10xf32, #tpu.memory_space<vmem>>) attributes {dimension_semantics = [#tpu.dimension_semantics<arbitrary>], iteration_bounds = array<i64: 1>, scalar_prefetch = 0 : i64, scratch_operands = 0 : i64, tpu.core_type = #tpu.core_type<tc>, window_params = [{pipeline_mode = #tpu.pipeline_mode<synchronous>, transform_indices = @transform_0, window_bounds = array<i64: 2, 400>}, {pipeline_mode = #tpu.pipeline_mode<synchronous>, transform_indices = @transform_1, window_bounds = array<i64: 400, 120>}, {pipeline_mode = #tpu.pipeline_mode<synchronous>, transform_indices = @transform_2, window_bounds = array<i64: 1, 120>}, {pipeline_mode = #tpu.pipeline_mode<synchronous>, transform_indices = @transform_3, window_bounds = array<i64: 120, 84>}, {pipeline_mode = #tpu.pipeline_mode<synchronous>, transform_indices = @transform_4, window_bounds = array<i64: 1, 84>}, {pipeline_mode = #tpu.pipeline_mode<synchronous>, transform_indices = @transform_5, window_bounds = array<i64: 84, 10>}, {pipeline_mode = #tpu.pipeline_mode<synchronous>, transform_indices = @transform_6, window_bounds = array<i64: 1, 10>}, {pipeline_mode = #tpu.pipeline_mode<synchronous>, transform_indices = @transform_7, window_bounds = array<i64: 2, 10>}]} {
    %c0 = arith.constant 0 : index
    %c0_0 = arith.constant 0 : index
    %0 = vector.load %arg1[%c0, %c0_0] : memref<2x400xf32, #tpu.memory_space<vmem>>, vector<2x400xf32>
    %c0_1 = arith.constant 0 : index
    %c0_2 = arith.constant 0 : index
    %1 = vector.load %arg2[%c0_1, %c0_2] : memref<400x120xf32, #tpu.memory_space<vmem>>, vector<400x120xf32>
    %cst = arith.constant dense<0.000000e+00> : vector<2x120xf32>
    %2 = tpu.matmul %0, %1, %cst {dimension_numbers = #tpu.dot_dimension_numbers<[1], [0], [0], [1], [0, 0, 1, 1], [], []>} : vector<2x400xf32>, vector<400x120xf32>, vector<2x120xf32> -> vector<2x120xf32>
    %c0_3 = arith.constant 0 : index
    %c0_4 = arith.constant 0 : index
    %3 = vector.load %arg3[%c0_3, %c0_4] : memref<1x120xf32, #tpu.memory_space<vmem>>, vector<1x120xf32>
    %4 = vector.broadcast %3 : vector<1x120xf32> to vector<2x120xf32>
    %5 = arith.addf %2, %4 : vector<2x120xf32>
    %cst_5 = arith.constant 0.000000e+00 : f32
    %6 = vector.broadcast %cst_5 : f32 to vector<2x120xf32>
    %7 = arith.maximumf %5, %6 : vector<2x120xf32>
    %c0_6 = arith.constant 0 : index
    %c0_7 = arith.constant 0 : index
    %8 = vector.load %arg4[%c0_6, %c0_7] : memref<120x84xf32, #tpu.memory_space<vmem>>, vector<120x84xf32>
    %cst_8 = arith.constant dense<0.000000e+00> : vector<2x84xf32>
    %9 = tpu.matmul %7, %8, %cst_8 {dimension_numbers = #tpu.dot_dimension_numbers<[1], [0], [0], [1], [0, 0, 1, 1], [], []>} : vector<2x120xf32>, vector<120x84xf32>, vector<2x84xf32> -> vector<2x84xf32>
    %c0_9 = arith.constant 0 : index
    %c0_10 = arith.constant 0 : index
    %10 = vector.load %arg5[%c0_9, %c0_10] : memref<1x84xf32, #tpu.memory_space<vmem>>, vector<1x84xf32>
    %11 = vector.broadcast %10 : vector<1x84xf32> to vector<2x84xf32>
    %12 = arith.addf %9, %11 : vector<2x84xf32>
    %cst_11 = arith.constant 0.000000e+00 : f32
    %13 = vector.broadcast %cst_11 : f32 to vector<2x84xf32>
    %14 = arith.maximumf %12, %13 : vector<2x84xf32>
    %c0_12 = arith.constant 0 : index
    %c0_13 = arith.constant 0 : index
    %15 = vector.load %arg6[%c0_12, %c0_13] : memref<84x10xf32, #tpu.memory_space<vmem>>, vector<84x10xf32>
    %cst_14 = arith.constant dense<0.000000e+00> : vector<2x10xf32>
    %16 = tpu.matmul %14, %15, %cst_14 {dimension_numbers = #tpu.dot_dimension_numbers<[1], [0], [0], [1], [0, 0, 1, 1], [], []>} : vector<2x84xf32>, vector<84x10xf32>, vector<2x10xf32> -> vector<2x10xf32>
    %c0_15 = arith.constant 0 : index
    %c0_16 = arith.constant 0 : index
    %17 = vector.load %arg7[%c0_15, %c0_16] : memref<1x10xf32, #tpu.memory_space<vmem>>, vector<1x10xf32>
    %18 = vector.broadcast %17 : vector<1x10xf32> to vector<2x10xf32>
    %19 = arith.addf %16, %18 : vector<2x10xf32>
    %c0_17 = arith.constant 0 : index
    %c0_18 = arith.constant 0 : index
    %20 = vector.load %arg8[%c0_17, %c0_18] : memref<2x10xf32, #tpu.memory_space<vmem>>, vector<2x10xf32>
    tpu.vector_store %arg8[%c0_17, %c0_18], %19 {strides = array<i32>} : memref<2x10xf32, #tpu.memory_space<vmem>>, vector<2x10xf32>,
    return
  }
  func.func @transform_0(%arg0: i32) -> (i32, i32) {
    %c0_i32 = arith.constant 0 : i32
    %c0_i32_0 = arith.constant 0 : i32
    %c0_i32_1 = arith.constant 0 : i32
    return %c0_i32, %c0_i32_0 : i32, i32
  }
  func.func @transform_1(%arg0: i32) -> (i32, i32) {
    %c0_i32 = arith.constant 0 : i32
    %c0_i32_0 = arith.constant 0 : i32
    %c0_i32_1 = arith.constant 0 : i32
    return %c0_i32, %c0_i32_0 : i32, i32
  }
  func.func @transform_2(%arg0: i32) -> (i32, i32) {
    %c0_i32 = arith.constant 0 : i32
    %c0_i32_0 = arith.constant 0 : i32
    %c0_i32_1 = arith.constant 0 : i32
    return %c0_i32, %c0_i32_0 : i32, i32
  }
  func.func @transform_3(%arg0: i32) -> (i32, i32) {
    %c0_i32 = arith.constant 0 : i32
    %c0_i32_0 = arith.constant 0 : i32
    %c0_i32_1 = arith.constant 0 : i32
    return %c0_i32, %c0_i32_0 : i32, i32
  }
  func.func @transform_4(%arg0: i32) -> (i32, i32) {
    %c0_i32 = arith.constant 0 : i32
    %c0_i32_0 = arith.constant 0 : i32
    %c0_i32_1 = arith.constant 0 : i32
    return %c0_i32, %c0_i32_0 : i32, i32
  }
  func.func @transform_5(%arg0: i32) -> (i32, i32) {
    %c0_i32 = arith.constant 0 : i32
    %c0_i32_0 = arith.constant 0 : i32
    %c0_i32_1 = arith.constant 0 : i32
    return %c0_i32, %c0_i32_0 : i32, i32
  }
  func.func @transform_6(%arg0: i32) -> (i32, i32) {
    %c0_i32 = arith.constant 0 : i32
    %c0_i32_0 = arith.constant 0 : i32
    %c0_i32_1 = arith.constant 0 : i32
    return %c0_i32, %c0_i32_0 : i32, i32
  }
  func.func @transform_7(%arg0: i32) -> (i32, i32) {
    %c0_i32 = arith.constant 0 : i32
    %c0_i32_0 = arith.constant 0 : i32
    %c0_i32_1 = arith.constant 0 : i32
    return %c0_i32, %c0_i32_0 : i32, i32
  }
}

</mosaic_0001>

<llo_original>
// kernel: lenet_forward.3
$region0: #{lenet_forward.3}
  #allocation0 [shape = 'u32[]', space=smem, size = 0x4, offset = 0x4, fixed_abs, tag = 'smem constant byte address 0x4 - core index']
  #allocation1 [shape = 'u32[144,128]{1,0:T(1,128)}', space=vmem, size = 0x12000, scoped, tag = 'internal scratch']
  %s0 = inlined_call_operand.hbm [shape: f32[6,25], index: 0, kind: input, shape index: {}]
  %s1 = inlined_call_operand.vmem [shape: f32[25,1568], index: 1, kind: input, shape index: {}]
  %s2 = inlined_call_operand.vmem [shape: f32[6,1], index: 2, kind: input, shape index: {}]
  %s3 = inlined_call_operand.vmem [shape: f32[6,1568], index: 3, kind: output, shape index: {}]
  %s4 = sld [smem:[#allocation0]]
  $region26: #{lenet_forward.3} parent=0
    _
  %s6 = ssub.s32 1, %s4
  %s7 = scalar_select 0, %s6, %s4
  $region1: #{lenet_forward.3} parent=0
    #allocation2 [shape = 'u8[4096]{0}', space=vmem, size = 0x1000, scoped, tag = 'input window, operand 0, single buffered']
    #allocation3 [shape = 's32[1]{0}', space=sflag, size = 0x4, scoped, tag = 'scoped memory for lenet_forward.3']
    %8 = vsyncpa [#allocation3], 0
    // Predicated region
    $region2: #{lenet_forward.3} parent=1 // pred_check
      _
    $region3: #{lenet_forward.3} parent=1 // pred_check_branch
      %10 = sbr.rel (0) target = $region5
    $region4: #{lenet_forward.3} parent=1 // pred_region
      %s12 = ssub.s32 128, 128
      %13 = vsyncadd [#allocation3], %s12
      %s15 = sshll.u32 [#allocation2], 4
      %s16 = int_to_ptr.vmem [resolvable:$true] %s15
      %18 = dma.hbm_to_vmem [thread:$0]  %s0, 128, %s16, [#allocation3]
    $region5: #{lenet_forward.3} parent=1 // pred_fallthru
      _
    // Predicated region
    $region6: #{lenet_forward.3} parent=1 // pred_check
      _
    $region7: #{lenet_forward.3} parent=1 // pred_check_branch
      %20 = sbr.rel (0) target = $region9
    $region8: #{lenet_forward.3} parent=1 // pred_region
      _
    $region9: #{lenet_forward.3} parent=1 // pred_fallthru
      _
    // Predicated region
    $region10: #{lenet_forward.3} parent=1 // pred_check
      _
    $region11: #{lenet_forward.3} parent=1 // pred_check_branch
      %22 = sbr.rel (0) target = $region13
    $region12: #{lenet_forward.3} parent=1 // pred_region
      _
    $region13: #{lenet_forward.3} parent=1 // pred_fallthru
      _
    // Predicated region
    $region14: #{lenet_forward.3} parent=1 // pred_check
      _
    $region15: #{lenet_forward.3} parent=1 // pred_check_branch
      %24 = sbr.rel (0) target = $region17
    $region16: #{lenet_forward.3} parent=1 // pred_region
      %25 = dma.done [#allocation3], 128
    $region17: #{lenet_forward.3} parent=1 // pred_fallthru
      _
    %v26 = vld [vmem:[#allocation2] sm:$0x3f]
    %v27 = vld [vmem:[%s1] sm:$0xff]
    %v28 = vld [vmem:[%s1 + $0x8] sm:$0xff]
    %v29 = vld [vmem:[%s1 + $0x10] sm:$0xff]
    %v30 = vld [vmem:[%s1 + $0x18] sm:$0xff]
    %v31 = vld [vmem:[%s1 + $0x20] sm:$0xff]
    %v32 = vld [vmem:[%s1 + $0x28] sm:$0xff]
    %v33 = vld [vmem:[%s1 + $0x30] sm:$0xff]
    %v34 = vld [vmem:[%s1 + $0x38] sm:$0xff]
    %v35 = vld [vmem:[%s1 + $0x40] sm:$0xff]
    %v36 = vld [vmem:[%s1 + $0x48] sm:$0xff]
    %v37 = vld [vmem:[%s1 + $0x50] sm:$0xff]
    %v38 = vld [vmem:[%s1 + $0x58] sm:$0xff]
    %v39 = vld [vmem:[%s1 + $0x60] sm:$0xff]
    %v40 = vld [vmem:[%s1 + $0x68] sm:$0xff]
    %v41 = vld [vmem:[%s1 + $0x70] sm:$0xff]
    %v42 = vld [vmem:[%s1 + $0x78] sm:$0xff]
    %v43 = vld [vmem:[%s1 + $0x80] sm:$0xff]
    %v44 = vld [vmem:[%s1 + $0x88] sm:$0xff]
    %v45 = vld [vmem:[%s1 + $0x90] sm:$0xff]
    %v46 = vld [vmem:[%s1 + $0x98] sm:$0xff]
    %v47 = vld [vmem:[%s1 + $0xa0] sm:$0xff]
    %v48 = vld [vmem:[%s1 + $0xa8] sm:$0xff]
    %v49 = vld [vmem:[%s1 + $0xb0] sm:$0xff]
    %v50 = vld [vmem:[%s1 + $0xb8] sm:$0xff]
    %v51 = vld [vmem:[%s1 + $0xc0] sm:$0xff]
    %v52 = vld [vmem:[%s1 + $0xc8] sm:$0xff]
    %v53 = vld [vmem:[%s1 + $0xd0] sm:$0xff]
    %v54 = vld [vmem:[%s1 + $0xd8] sm:$0xff]
    %v55 = vld [vmem:[%s1 + $0xe0] sm:$0xff]
    %v56 = vld [vmem:[%s1 + $0xe8] sm:$0xff]
    %v57 = vld [vmem:[%s1 + $0xf0] sm:$0xff]
    %v58 = vld [vmem:[%s1 + $0xf8] sm:$0xff]
    %v59 = vld [vmem:[%s1 + $0x100] sm:$0xff]
    %v60 = vld [vmem:[%s1 + $0x108] sm:$0xff]
    %v61 = vld [vmem:[%s1 + $0x110] sm:$0xff]
    %v62 = vld [vmem:[%s1 + $0x118] sm:$0xff]
    %v63 = vld [vmem:[%s1 + $0x120] sm:$0xff]
    %v64 = vld [vmem:[%s1 + $0x128] sm:$0xff]
    %v65 = vld [vmem:[%s1 + $0x130] sm:$0xff]
    %v66 = vld [vmem:[%s1 + $0x138] sm:$0x1]
    %v67 = vld [vmem:[%s1 + $0x140] sm:$0x1]
    %v68 = vld [vmem:[%s1 + $0x148] sm:$0x1]
    %v69 = vld [vmem:[%s1 + $0x150] sm:$0x1]
    %v70 = vld [vmem:[%s1 + $0x158] sm:$0x1]
    %v71 = vld [vmem:[%s1 + $0x160] sm:$0x1]
    %v72 = vld [vmem:[%s1 + $0x168] sm:$0x1]
    %v73 = vld [vmem:[%s1 + $0x170] sm:$0x1]
    %v74 = vld [vmem:[%s1 + $0x178] sm:$0x1]
    %v75 = vld [vmem:[%s1 + $0x180] sm:$0x1]
    %v76 = vld [vmem:[%s1 + $0x188] sm:$0x1]
    %v77 = vld [vmem:[%s1 + $0x190] sm:$0x1]
    %v78 = vld [vmem:[%s1 + $0x198] sm:$0x1]
    %v79 = vld [vmem:[%s2] sm:$0x3f]
    %81 = vset.pattern.permute.xlu0 0
    %82 = vperm.xlu0 %81, %v79
    %v83 = vpop.permute.xlu0 %82
    %vm85 = vcmask 203776
    %v87 = vsel %vm85, %v26, 0
    %vm89 = vcmask 1040384
    %v91 = vsel %vm89, %v66, 0
    %v94 = vsel %vm89, %v67, 0
    %v97 = vsel %vm89, %v68, 0
    %v100 = vsel %vm89, %v69, 0
    %v103 = vsel %vm89, %v70, 0
    %v106 = vsel %vm89, %v71, 0
    %v109 = vsel %vm89, %v72, 0
    %v112 = vsel %vm89, %v73, 0
    %v115 = vsel %vm89, %v74, 0
    %v118 = vsel %vm89, %v75, 0
    %v121 = vsel %vm89, %v76, 0
    %v124 = vsel %vm89, %v77, 0
    %v127 = vsel %vm89, %v78, 0
    %129 = vmatprep.subr.mxu0 %v28
    %130 = vmatpush1.msra.mxu0 %v27
    %131 = vmatprep.subr.mxu0 %v41
    %132 = vmatpush1.msra.mxu0 %v40
    %133 = vmatprep.subr.mxu0 %v54
    %134 = vmatpush1.msra.mxu0 %v53
    %135 = vmatprep.subr.mxu0 %v94
    %136 = vmatpush1.msra.mxu0 %v91
    %137 = vmatprep.subr.mxu0 0.0
    %138 = vmatpush1.msra.mxu0 0.0
    %139 = vmatprep.subr.mxu0 0.0
    %140 = vmatpush1.msra.mxu0 0.0
    %141 = vmatprep.subr.mxu0 0.0
    %142 = vmatpush1.msra.mxu0 0.0
    %143 = vmatprep.subr.mxu0 0.0
    %144 = vmatpush1.msra.mxu0 0.0
    %145 = vmatprep.subr.mxu0 0.0
    %146 = vmatpush1.msra.mxu0 0.0
    %147 = vmatprep.subr.mxu0 0.0
    %148 = vmatpush1.msra.mxu0 0.0
    %149 = vmatprep.subr.mxu0 0.0
    %150 = vmatpush1.msra.mxu0 0.0
    %151 = vmatprep.subr.mxu0 0.0
    %152 = vmatpush1.msra.mxu0 0.0
    %153 = vmatprep.subr.mxu0 0.0
    %154 = vmatpush1.msra.mxu0 0.0
    %155 = vmatprep.subr.mxu0 0.0
    %156 = vmatpush1.msra.mxu0 0.0
    %157 = vmatprep.subr.mxu0 0.0
    %158 = vmatpush1.msra.mxu0 0.0
    %159 = vmatprep.subr.mxu0 0.0
    %160 = vmatpush1.msra.mxu0 0.0
    %161 = vmatprep.subr.mxu0 0.0
    %162 = vmatpush1.msra.mxu0 0.0
    %163 = vmatprep.subr.mxu0 0.0
    %164 = vmatpush1.msra.mxu0 0.0
    %165 = vmatprep.subr.mxu0 0.0
    %166 = vmatpush1.msra.mxu0 0.0
    %167 = vmatprep.subr.mxu0 0.0
    %168 = vmatpush1.msra.mxu0 0.0
    %169 = vmatprep.subr.mxu0 0.0
    %170 = vmatpush1.msra.mxu0 0.0
    %171 = vmatprep.subr.mxu0 0.0
    %172 = vmatpush1.msra.mxu0 0.0
    %173 = vmatprep.subr.mxu0 0.0
    %174 = vmatpush1.msra.mxu0 0.0
    %175 = vmatprep.subr.mxu0 0.0
    %176 = vmatpush1.msra.mxu0 0.0
    %177 = vmatprep.subr.mxu0 0.0
    %178 = vmatpush1.msra.mxu0 0.0
    %179 = vmatprep.subr.mxu0 0.0
    %180 = vmatpush1.msra.mxu0 0.0
    %181 = vmatprep.subr.mxu0 0.0
    %182 = vmatpush1.msra.mxu0 0.0
    %183 = vmatprep.subr.mxu0 0.0
    %184 = vmatpush1.msra.mxu0 0.0
    %185 = vmatprep.subr.mxu0 0.0
    %186 = vmatpush1.msra.mxu0 0.0
    %187 = vmatprep.subr.mxu0 0.0
    %188 = vmatpush1.msra.mxu0 0.0
    %189 = vmatprep.subr.mxu0 0.0
    %190 = vmatpush1.msra.mxu0 0.0
    %191 = vmatprep.subr.mxu0 0.0
    %192 = vmatpush1.msra.mxu0 0.0
    %193 = vmatprep.mubr.f32.mxu0 0.0
    %194 = vmatmul.mubr.f32.gmra.mrb[0].mxu0 %v87
    %v195 = vpop.f32.mrb[0].mxu0
    %v196 = vadd.f32 %v83, %v195
    %v197 = vpop.f32.mrb[0].mxu0
    %v198 = vadd.f32 %v83, %v197
    %199 = vdwg.mxu0
    %200 = vmatprep.subr.mxu0 %v30
    %201 = vmatpush1.msra.mxu0 %v29
    %202 = vmatprep.subr.mxu0 %v43
    %203 = vmatpush1.msra.mxu0 %v42
    %204 = vmatprep.subr.mxu0 %v56
    %205 = vmatpush1.msra.mxu0 %v55
    %206 = vmatprep.subr.mxu0 %v100
    %207 = vmatpush1.msra.mxu0 %v97
    %208 = vmatprep.subr.mxu0 0.0
    %209 = vmatpush1.msra.mxu0 0.0
    %210 = vmatprep.subr.mxu0 0.0
    %211 = vmatpush1.msra.mxu0 0.0
    %212 = vmatprep.subr.mxu0 0.0
    %213 = vmatpush1.msra.mxu0 0.0
    %214 = vmatprep.subr.mxu0 0.0
    %215 = vmatpush1.msra.mxu0 0.0
    %216 = vmatprep.subr.mxu0 0.0
    %217 = vmatpush1.msra.mxu0 0.0
    %218 = vmatprep.subr.mxu0 0.0
    %219 = vmatpush1.msra.mxu0 0.0
    %220 = vmatprep.subr.mxu0 0.0
    %221 = vmatpush1.msra.mxu0 0.0
    %222 = vmatprep.subr.mxu0 0.0
    %223 = vmatpush1.msra.mxu0 0.0
    %224 = vmatprep.subr.mxu0 0.0
    %225 = vmatpush1.msra.mxu0 0.0
    %226 = vmatprep.subr.mxu0 0.0
    %227 = vmatpush1.msra.mxu0 0.0
    %228 = vmatprep.subr.mxu0 0.0
    %229 = vmatpush1.msra.mxu0 0.0
    %230 = vmatprep.subr.mxu0 0.0
    %231 = vmatpush1.msra.mxu0 0.0
    %232 = vmatprep.subr.mxu0 0.0
    %233 = vmatpush1.msra.mxu0 0.0
    %234 = vmatprep.subr.mxu0 0.0
    %235 = vmatpush1.msra.mxu0 0.0
    %236 = vmatprep.subr.mxu0 0.0
    %237 = vmatpush1.msra.mxu0 0.0
    %238 = vmatprep.subr.mxu0 0.0
    %239 = vmatpush1.msra.mxu0 0.0
    %240 = vmatprep.subr.mxu0 0.0
    %241 = vmatpush1.msra.mxu0 0.0
    %242 = vmatprep.subr.mxu0 0.0
    %243 = vmatpush1.msra.mxu0 0.0
    %244 = vmatprep.subr.mxu0 0.0
    %245 = vmatpush1.msra.mxu0 0.0
    %246 = vmatprep.subr.mxu0 0.0
    %247 = vmatpush1.msra.mxu0 0.0
    %248 = vmatprep.subr.mxu0 0.0
    %249 = vmatpush1.msra.mxu0 0.0
    %250 = vmatprep.subr.mxu0 0.0
    %251 = vmatpush1.msra.mxu0 0.0
    %252 = vmatprep.subr.mxu0 0.0
    %253 = vmatpush1.msra.mxu0 0.0
    %254 = vmatprep.subr.mxu0 0.0
    %255 = vmatpush1.msra.mxu0 0.0
    %256 = vmatprep.subr.mxu0 0.0
    %257 = vmatpush1.msra.mxu0 0.0
    %258 = vmatprep.subr.mxu0 0.0
    %259 = vmatpush1.msra.mxu0 0.0
    %260 = vmatprep.subr.mxu0 0.0
    %261 = vmatpush1.msra.mxu0 0.0
    %262 = vmatprep.subr.mxu0 0.0
    %263 = vmatpush1.msra.mxu0 0.0
    %264 = vmatprep.mubr.f32.mxu0 0.0
    %265 = vmatmul.mubr.f32.gmra.mrb[0].mxu0 %v87
    %v266 = vpop.f32.mrb[0].mxu0
    %v267 = vadd.f32 %v83, %v266
    %v268 = vpop.f32.mrb[0].mxu0
    %v269 = vadd.f32 %v83, %v268
    %270 = vdwg.mxu0
    %271 = vmatprep.subr.mxu0 %v32
    %272 = vmatpush1.msra.mxu0 %v31
    %273 = vmatprep.subr.mxu0 %v45
    %274 = vmatpush1.msra.mxu0 %v44
    %275 = vmatprep.subr.mxu0 %v58
    %276 = vmatpush1.msra.mxu0 %v57
    %277 = vmatprep.subr.mxu0 %v106
    %278 = vmatpush1.msra.mxu0 %v103
    %279 = vmatprep.subr.mxu0 0.0
    %280 = vmatpush1.msra.mxu0 0.0
    %281 = vmatprep.subr.mxu0 0.0
    %282 = vmatpush1.msra.mxu0 0.0
    %283 = vmatprep.subr.mxu0 0.0
    %284 = vmatpush1.msra.mxu0 0.0
    %285 = vmatprep.subr.mxu0 0.0
    %286 = vmatpush1.msra.mxu0 0.0
    %287 = vmatprep.subr.mxu0 0.0
    %288 = vmatpush1.msra.mxu0 0.0
    %289 = vmatprep.subr.mxu0 0.0
    %290 = vmatpush1.msra.mxu0 0.0
    %291 = vmatprep.subr.mxu0 0.0
    %292 = vmatpush1.msra.mxu0 0.0
    %293 = vmatprep.subr.mxu0 0.0
    %294 = vmatpush1.msra.mxu0 0.0
    %295 = vmatprep.subr.mxu0 0.0
    %296 = vmatpush1.msra.mxu0 0.0
    %297 = vmatprep.subr.mxu0 0.0
    %298 = vmatpush1.msra.mxu0 0.0
    %299 = vmatprep.subr.mxu0 0.0
    %300 = vmatpush1.msra.mxu0 0.0
    %301 = vmatprep.subr.mxu0 0.0
    %302 = vmatpush1.msra.mxu0 0.0
    %303 = vmatprep.subr.mxu0 0.0
    %304 = vmatpush1.msra.mxu0 0.0
    %305 = vmatprep.subr.mxu0 0.0
    %306 = vmatpush1.msra.mxu0 0.0
    %307 = vmatprep.subr.mxu0 0.0
    %308 = vmatpush1.msra.mxu0 0.0
    %309 = vmatprep.subr.mxu0 0.0
    %310 = vmatpush1.msra.mxu0 0.0
    %311 = vmatprep.subr.mxu0 0.0
    %312 = vmatpush1.msra.mxu0 0.0
    %313 = vmatprep.subr.mxu0 0.0
    %314 = vmatpush1.msra.mxu0 0.0
    %315 = vmatprep.subr.mxu0 0.0
    %316 = vmatpush1.msra.mxu0 0.0
    %317 = vmatprep.subr.mxu0 0.0
    %318 = vmatpush1.msra.mxu0 0.0
    %319 = vmatprep.subr.mxu0 0.0
    %320 = vmatpush1.msra.mxu0 0.0
    %321 = vmatprep.subr.mxu0 0.0
    %322 = vmatpush1.msra.mxu0 0.0
    %323 = vmatprep.subr.mxu0 0.0
    %324 = vmatpush1.msra.mxu0 0.0
    %325 = vmatprep.subr.mxu0 0.0
    %326 = vmatpush1.msra.mxu0 0.0
    %327 = vmatprep.subr.mxu0 0.0
    %328 = vmatpush1.msra.mxu0 0.0
    %329 = vmatprep.subr.mxu0 0.0
    %330 = vmatpush1.msra.mxu0 0.0
    %331 = vmatprep.subr.mxu0 0.0
    %332 = vmatpush1.msra.mxu0 0.0
    %333 = vmatprep.subr.mxu0 0.0
    %334 = vmatpush1.msra.mxu0 0.0
    %335 = vmatprep.mubr.f32.mxu0 0.0
    %336 = vmatmul.mubr.f32.gmra.mrb[0].mxu0 %v87
    %v337 = vpop.f32.mrb[0].mxu0
    %v338 = vadd.f32 %v83, %v337
    %v339 = vpop.f32.mrb[0].mxu0
    %v340 = vadd.f32 %v83, %v339
    %341 = vdwg.mxu0
    %342 = vmatprep.subr.mxu0 %v34
    %343 = vmatpush1.msra.mxu0 %v33
    %344 = vmatprep.subr.mxu0 %v47
    %345 = vmatpush1.msra.mxu0 %v46
    %346 = vmatprep.subr.mxu0 %v60
    %347 = vmatpush1.msra.mxu0 %v59
    %348 = vmatprep.subr.mxu0 %v112
    %349 = vmatpush1.msra.mxu0 %v109
    %350 = vmatprep.subr.mxu0 0.0
    %351 = vmatpush1.msra.mxu0 0.0
    %352 = vmatprep.subr.mxu0 0.0
    %353 = vmatpush1.msra.mxu0 0.0
    %354 = vmatprep.subr.mxu0 0.0
    %355 = vmatpush1.msra.mxu0 0.0
    %356 = vmatprep.subr.mxu0 0.0
    %357 = vmatpush1.msra.mxu0 0.0
    %358 = vmatprep.subr.mxu0 0.0
    %359 = vmatpush1.msra.mxu0 0.0
    %360 = vmatprep.subr.mxu0 0.0
    %361 = vmatpush1.msra.mxu0 0.0
    %362 = vmatprep.subr.mxu0 0.0
    %363 = vmatpush1.msra.mxu0 0.0
    %364 = vmatprep.subr.mxu0 0.0
    %365 = vmatpush1.msra.mxu0 0.0
    %366 = vmatprep.subr.mxu0 0.0
    %367 = vmatpush1.msra.mxu0 0.0
    %368 = vmatprep.subr.mxu0 0.0
    %369 = vmatpush1.msra.mxu0 0.0
    %370 = vmatprep.subr.mxu0 0.0
    %371 = vmatpush1.msra.mxu0 0.0
    %372 = vmatprep.subr.mxu0 0.0
    %373 = vmatpush1.msra.mxu0 0.0
    %374 = vmatprep.subr.mxu0 0.0
    %375 = vmatpush1.msra.mxu0 0.0
    %376 = vmatprep.subr.mxu0 0.0
    %377 = vmatpush1.msra.mxu0 0.0
    %378 = vmatprep.subr.mxu0 0.0
    %379 = vmatpush1.msra.mxu0 0.0
    %380 = vmatprep.subr.mxu0 0.0
    %381 = vmatpush1.msra.mxu0 0.0
    %382 = vmatprep.subr.mxu0 0.0
    %383 = vmatpush1.msra.mxu0 0.0
    %384 = vmatprep.subr.mxu0 0.0
    %385 = vmatpush1.msra.mxu0 0.0
    %386 = vmatprep.subr.mxu0 0.0
    %387 = vmatpush1.msra.mxu0 0.0
    %388 = vmatprep.subr.mxu0 0.0
    %389 = vmatpush1.msra.mxu0 0.0
    %390 = vmatprep.subr.mxu0 0.0
    %391 = vmatpush1.msra.mxu0 0.0
    %392 = vmatprep.subr.mxu0 0.0
    %393 = vmatpush1.msra.mxu0 0.0
    %394 = vmatprep.subr.mxu0 0.0
    %395 = vmatpush1.msra.mxu0 0.0
    %396 = vmatprep.subr.mxu0 0.0
    %397 = vmatpush1.msra.mxu0 0.0
    %398 = vmatprep.subr.mxu0 0.0
    %399 = vmatpush1.msra.mxu0 0.0
    %400 = vmatprep.subr.mxu0 0.0
    %401 = vmatpush1.msra.mxu0 0.0
    %402 = vmatprep.subr.mxu0 0.0
    %403 = vmatpush1.msra.mxu0 0.0
    %404 = vmatprep.subr.mxu0 0.0
    %405 = vmatpush1.msra.mxu0 0.0
    %406 = vmatprep.mubr.f32.mxu0 0.0
    %407 = vmatmul.mubr.f32.gmra.mrb[0].mxu0 %v87
    %v408 = vpop.f32.mrb[0].mxu0
    %v409 = vadd.f32 %v83, %v408
    %v410 = vpop.f32.mrb[0].mxu0
    %v411 = vadd.f32 %v83, %v410
    %412 = vdwg.mxu0
    %413 = vmatprep.subr.mxu0 %v36
    %414 = vmatpush1.msra.mxu0 %v35
    %415 = vmatprep.subr.mxu0 %v49
    %416 = vmatpush1.msra.mxu0 %v48
    %417 = vmatprep.subr.mxu0 %v62
    %418 = vmatpush1.msra.mxu0 %v61
    %419 = vmatprep.subr.mxu0 %v118
    %420 = vmatpush1.msra.mxu0 %v115
    %421 = vmatprep.subr.mxu0 0.0
    %422 = vmatpush1.msra.mxu0 0.0
    %423 = vmatprep.subr.mxu0 0.0
    %424 = vmatpush1.msra.mxu0 0.0
    %425 = vmatprep.subr.mxu0 0.0
    %426 = vmatpush1.msra.mxu0 0.0
    %427 = vmatprep.subr.mxu0 0.0
    %428 = vmatpush1.msra.mxu0 0.0
    %429 = vmatprep.subr.mxu0 0.0
    %430 = vmatpush1.msra.mxu0 0.0
    %431 = vmatprep.subr.mxu0 0.0
    %432 = vmatpush1.msra.mxu0 0.0
    %433 = vmatprep.subr.mxu0 0.0
    %434 = vmatpush1.msra.mxu0 0.0
    %435 = vmatprep.subr.mxu0 0.0
    %436 = vmatpush1.msra.mxu0 0.0
    %437 = vmatprep.subr.mxu0 0.0
    %438 = vmatpush1.msra.mxu0 0.0
    %439 = vmatprep.subr.mxu0 0.0
    %440 = vmatpush1.msra.mxu0 0.0
    %441 = vmatprep.subr.mxu0 0.0
    %442 = vmatpush1.msra.mxu0 0.0
    %443 = vmatprep.subr.mxu0 0.0
    %444 = vmatpush1.msra.mxu0 0.0
    %445 = vmatprep.subr.mxu0 0.0
    %446 = vmatpush1.msra.mxu0 0.0
    %447 = vmatprep.subr.mxu0 0.0
    %448 = vmatpush1.msra.mxu0 0.0
    %449 = vmatprep.subr.mxu0 0.0
    %450 = vmatpush1.msra.mxu0 0.0
    %451 = vmatprep.subr.mxu0 0.0
    %452 = vmatpush1.msra.mxu0 0.0
    %453 = vmatprep.subr.mxu0 0.0
    %454 = vmatpush1.msra.mxu0 0.0
    %455 = vmatprep.subr.mxu0 0.0
    %456 = vmatpush1.msra.mxu0 0.0
    %457 = vmatprep.subr.mxu0 0.0
    %458 = vmatpush1.msra.mxu0 0.0
    %459 = vmatprep.subr.mxu0 0.0
    %460 = vmatpush1.msra.mxu0 0.0
    %461 = vmatprep.subr.mxu0 0.0
    %462 = vmatpush1.msra.mxu0 0.0
    %463 = vmatprep.subr.mxu0 0.0
    %464 = vmatpush1.msra.mxu0 0.0
    %465 = vmatprep.subr.mxu0 0.0
    %466 = vmatpush1.msra.mxu0 0.0
    %467 = vmatprep.subr.mxu0 0.0
    %468 = vmatpush1.msra.mxu0 0.0
    %469 = vmatprep.subr.mxu0 0.0
    %470 = vmatpush1.msra.mxu0 0.0
    %471 = vmatprep.subr.mxu0 0.0
    %472 = vmatpush1.msra.mxu0 0.0
    %473 = vmatprep.subr.mxu0 0.0
    %474 = vmatpush1.msra.mxu0 0.0
    %475 = vmatprep.subr.mxu0 0.0
    %476 = vmatpush1.msra.mxu0 0.0
    %477 = vmatprep.mubr.f32.mxu0 0.0
    %478 = vmatmul.mubr.f32.gmra.mrb[0].mxu0 %v87
    %v479 = vpop.f32.mrb[0].mxu0
    %v480 = vadd.f32 %v83, %v479
    %v481 = vpop.f32.mrb[0].mxu0
    %v482 = vadd.f32 %v83, %v481
    %483 = vdwg.mxu0
    %484 = vmatprep.subr.mxu0 %v38
    %485 = vmatpush1.msra.mxu0 %v37
    %486 = vmatprep.subr.mxu0 %v51
    %487 = vmatpush1.msra.mxu0 %v50
    %488 = vmatprep.subr.mxu0 %v64
    %489 = vmatpush1.msra.mxu0 %v63
    %490 = vmatprep.subr.mxu0 %v124
    %491 = vmatpush1.msra.mxu0 %v121
    %492 = vmatprep.subr.mxu0 0.0
    %493 = vmatpush1.msra.mxu0 0.0
    %494 = vmatprep.subr.mxu0 0.0
    %495 = vmatpush1.msra.mxu0 0.0
    %496 = vmatprep.subr.mxu0 0.0
    %497 = vmatpush1.msra.mxu0 0.0
    %498 = vmatprep.subr.mxu0 0.0
    %499 = vmatpush1.msra.mxu0 0.0
    %500 = vmatprep.subr.mxu0 0.0
    %501 = vmatpush1.msra.mxu0 0.0
    %502 = vmatprep.subr.mxu0 0.0
    %503 = vmatpush1.msra.mxu0 0.0
    %504 = vmatprep.subr.mxu0 0.0
    %505 = vmatpush1.msra.mxu0 0.0
    %506 = vmatprep.subr.mxu0 0.0
    %507 = vmatpush1.msra.mxu0 0.0
    %508 = vmatprep.subr.mxu0 0.0
    %509 = vmatpush1.msra.mxu0 0.0
    %510 = vmatprep.subr.mxu0 0.0
    %511 = vmatpush1.msra.mxu0 0.0
    %512 = vmatprep.subr.mxu0 0.0
    %513 = vmatpush1.msra.mxu0 0.0
    %514 = vmatprep.subr.mxu0 0.0
    %515 = vmatpush1.msra.mxu0 0.0
    %516 = vmatprep.subr.mxu0 0.0
    %517 = vmatpush1.msra.mxu0 0.0
    %518 = vmatprep.subr.mxu0 0.0
    %519 = vmatpush1.msra.mxu0 0.0
    %520 = vmatprep.subr.mxu0 0.0
    %521 = vmatpush1.msra.mxu0 0.0
    %522 = vmatprep.subr.mxu0 0.0
    %523 = vmatpush1.msra.mxu0 0.0
    %524 = vmatprep.subr.mxu0 0.0
    %525 = vmatpush1.msra.mxu0 0.0
    %526 = vmatprep.subr.mxu0 0.0
    %527 = vmatpush1.msra.mxu0 0.0
    %528 = vmatprep.subr.mxu0 0.0
    %529 = vmatpush1.msra.mxu0 0.0
    %530 = vmatprep.subr.mxu0 0.0
    %531 = vmatpush1.msra.mxu0 0.0
    %532 = vmatprep.subr.mxu0 0.0
    %533 = vmatpush1.msra.mxu0 0.0
    %534 = vmatprep.subr.mxu0 0.0
    %535 = vmatpush1.msra.mxu0 0.0
    %536 = vmatprep.subr.mxu0 0.0
    %537 = vmatpush1.msra.mxu0 0.0
    %538 = vmatprep.subr.mxu0 0.0
    %539 = vmatpush1.msra.mxu0 0.0
    %540 = vmatprep.subr.mxu0 0.0
    %541 = vmatpush1.msra.mxu0 0.0
    %542 = vmatprep.subr.mxu0 0.0
    %543 = vmatpush1.msra.mxu0 0.0
    %544 = vmatprep.subr.mxu0 0.0
    %545 = vmatpush1.msra.mxu0 0.0
    %546 = vmatprep.subr.mxu0 0.0
    %547 = vmatpush1.msra.mxu0 0.0
    %548 = vmatprep.mubr.f32.mxu0 0.0
    %549 = vmatmul.mubr.f32.gmra.mrb[0].mxu0 %v87
    %v550 = vpop.f32.mrb[0].mxu0
    %v551 = vadd.f32 %v83, %v550
    %v552 = vpop.f32.mrb[0].mxu0
    %v553 = vadd.f32 %v83, %v552
    %554 = vdwg.mxu0
    %555 = vmatprep.subr.mxu0 0.0
    %556 = vmatpush1.msra.mxu0 %v39
    %557 = vmatprep.subr.mxu0 0.0
    %558 = vmatpush1.msra.mxu0 %v52
    %559 = vmatprep.subr.mxu0 0.0
    %560 = vmatpush1.msra.mxu0 %v65
    %561 = vmatprep.subr.mxu0 0.0
    %562 = vmatpush1.msra.mxu0 %v127
    %563 = vmatprep.subr.mxu0 0.0
    %564 = vmatpush1.msra.mxu0 0.0
    %565 = vmatprep.subr.mxu0 0.0
    %566 = vmatpush1.msra.mxu0 0.0
    %567 = vmatprep.subr.mxu0 0.0
    %568 = vmatpush1.msra.mxu0 0.0
    %569 = vmatprep.subr.mxu0 0.0
    %570 = vmatpush1.msra.mxu0 0.0
    %571 = vmatprep.subr.mxu0 0.0
    %572 = vmatpush1.msra.mxu0 0.0
    %573 = vmatprep.subr.mxu0 0.0
    %574 = vmatpush1.msra.mxu0 0.0
    %575 = vmatprep.subr.mxu0 0.0
    %576 = vmatpush1.msra.mxu0 0.0
    %577 = vmatprep.subr.mxu0 0.0
    %578 = vmatpush1.msra.mxu0 0.0
    %579 = vmatprep.subr.mxu0 0.0
    %580 = vmatpush1.msra.mxu0 0.0
    %581 = vmatprep.subr.mxu0 0.0
    %582 = vmatpush1.msra.mxu0 0.0
    %583 = vmatprep.subr.mxu0 0.0
    %584 = vmatpush1.msra.mxu0 0.0
    %585 = vmatprep.subr.mxu0 0.0
    %586 = vmatpush1.msra.mxu0 0.0
    %587 = vmatprep.subr.mxu0 0.0
    %588 = vmatpush1.msra.mxu0 0.0
    %589 = vmatprep.subr.mxu0 0.0
    %590 = vmatpush1.msra.mxu0 0.0
    %591 = vmatprep.subr.mxu0 0.0
    %592 = vmatpush1.msra.mxu0 0.0
    %593 = vmatprep.subr.mxu0 0.0
    %594 = vmatpush1.msra.mxu0 0.0
    %595 = vmatprep.subr.mxu0 0.0
    %596 = vmatpush1.msra.mxu0 0.0
    %597 = vmatprep.subr.mxu0 0.0
    %598 = vmatpush1.msra.mxu0 0.0
    %599 = vmatprep.subr.mxu0 0.0
    %600 = vmatpush1.msra.mxu0 0.0
    %601 = vmatprep.subr.mxu0 0.0
    %602 = vmatpush1.msra.mxu0 0.0
    %603 = vmatprep.subr.mxu0 0.0
    %604 = vmatpush1.msra.mxu0 0.0
    %605 = vmatprep.subr.mxu0 0.0
    %606 = vmatpush1.msra.mxu0 0.0
    %607 = vmatprep.subr.mxu0 0.0
    %608 = vmatpush1.msra.mxu0 0.0
    %609 = vmatprep.subr.mxu0 0.0
    %610 = vmatpush1.msra.mxu0 0.0
    %611 = vmatprep.subr.mxu0 0.0
    %612 = vmatpush1.msra.mxu0 0.0
    %613 = vmatprep.subr.mxu0 0.0
    %614 = vmatpush1.msra.mxu0 0.0
    %615 = vmatprep.subr.mxu0 0.0
    %616 = vmatpush1.msra.mxu0 0.0
    %617 = vmatprep.subr.mxu0 0.0
    %618 = vmatpush1.msra.mxu0 0.0
    %619 = vmatprep.mubr.f32.mxu0 0.0
    %620 = vmatmul.mubr.f32.gmra.mrb[0].mxu0 %v87
    %v621 = vpop.f32.mrb[0].mxu0
    %v622 = vadd.f32 %v83, %v621
    %v623 = vpop.f32.mrb[0].mxu0
    %624 = vdwg.mxu0
    %v625 = vmax.f32 %v196, 0.0
    %v626 = vmax.f32 %v198, 0.0
    %v627 = vmax.f32 %v267, 0.0
    %v628 = vmax.f32 %v269, 0.0
    %v629 = vmax.f32 %v338, 0.0
    %v630 = vmax.f32 %v340, 0.0
    %v631 = vmax.f32 %v409, 0.0
    %v632 = vmax.f32 %v411, 0.0
    %v633 = vmax.f32 %v480, 0.0
    %v634 = vmax.f32 %v482, 0.0
    %v635 = vmax.f32 %v551, 0.0
    %v636 = vmax.f32 %v553, 0.0
    %v637 = vmax.f32 %v622, 0.0
    %638 = vst [vmem:[%s3] sm:$0x3f] %v625
    %639 = vst [vmem:[%s3 + $0x8] sm:$0x3f] %v626
    %640 = vst [vmem:[%s3 + $0x10] sm:$0x3f] %v627
    %641 = vst [vmem:[%s3 + $0x18] sm:$0x3f] %v628
    %642 = vst [vmem:[%s3 + $0x20] sm:$0x3f] %v629
    %643 = vst [vmem:[%s3 + $0x28] sm:$0x3f] %v630
    %644 = vst [vmem:[%s3 + $0x30] sm:$0x3f] %v631
    %645 = vst [vmem:[%s3 + $0x38] sm:$0x3f] %v632
    %646 = vst [vmem:[%s3 + $0x40] sm:$0x3f] %v633
    %647 = vst [vmem:[%s3 + $0x48] sm:$0x3f] %v634
    %648 = vst [vmem:[%s3 + $0x50] sm:$0x3f] %v635
    %649 = vst [vmem:[%s3 + $0x58] sm:$0x3f] %v636
    %vm650 = vcmask 259072
    %651 = vst.msk [vmem:[%s3 + $0x60] sm:$0x3f] %vm650, %v637
    // Predicated region
    $region18: #{lenet_forward.3} parent=1 // pred_check
      _
    $region19: #{lenet_forward.3} parent=1 // pred_check_branch
      %653 = sbr.rel (0) target = $region21
    $region20: #{lenet_forward.3} parent=1 // pred_region
      _
    $region21: #{lenet_forward.3} parent=1 // pred_fallthru
      _
    // Predicated region
    $region22: #{lenet_forward.3} parent=1 // pred_check
      _
    $region23: #{lenet_forward.3} parent=1 // pred_check_branch
      %655 = sbr.rel (0) target = $region25
    $region24: #{lenet_forward.3} parent=1 // pred_region
      _
    $region25: #{lenet_forward.3} parent=1 // pred_fallthru
      _
    %656 = vsyncpa [#allocation3], 1

// kernel: lenet_forward.4
$region0: #{lenet_forward.4}
  #allocation0 [shape = 'u32[]', space=smem, size = 0x4, offset = 0x4, fixed_abs, tag = 'smem constant byte address 0x4 - core index']
  #allocation1 [shape = 'u32[144,128]{1,0:T(1,128)}', space=vmem, size = 0x12000, scoped, tag = 'internal scratch']
  %s0 = inlined_call_operand.vmem [shape: f32[16,150], index: 0, kind: input, shape index: {}]
  %s1 = inlined_call_operand.vmem [shape: f32[150,200], index: 1, kind: input, shape index: {}]
  %s2 = inlined_call_operand.vmem [shape: f32[16,1], index: 2, kind: input, shape index: {}]
  %s3 = inlined_call_operand.vmem [shape: f32[16,200], index: 3, kind: output, shape index: {}]
  %s4 = sld [smem:[#allocation0]]
  $region22: #{lenet_forward.4} parent=0
    _
  %s6 = ssub.s32 1, %s4
  %s7 = scalar_select 0, %s6, %s4
  // Predicated region
  $region2: #{lenet_forward.4} parent=0 // pred_check
    _
  $region3: #{lenet_forward.4} parent=0 // pred_check_branch
    %9 = sbr.rel (0) target = $region5
  $region4: #{lenet_forward.4} parent=0 // pred_region
    _
  $region5: #{lenet_forward.4} parent=0 // pred_fallthru
    _
  // Predicated region
  $region6: #{lenet_forward.4} parent=0 // pred_check
    _
  $region7: #{lenet_forward.4} parent=0 // pred_check_branch
    %11 = sbr.rel (0) target = $region9
  $region8: #{lenet_forward.4} parent=0 // pred_region
    _
  $region9: #{lenet_forward.4} parent=0 // pred_fallthru
    _
  // Predicated region
  $region10: #{lenet_forward.4} parent=0 // pred_check
    _
  $region11: #{lenet_forward.4} parent=0 // pred_check_branch
    %13 = sbr.rel (0) target = $region13
  $region12: #{lenet_forward.4} parent=0 // pred_region
    _
  $region13: #{lenet_forward.4} parent=0 // pred_fallthru
    _
  %v14 = vld [vmem:[%s0] sm:$0xff]
  %v15 = vld [vmem:[%s0 + $0x8] sm:$0xff]
  %v16 = vld [vmem:[%s0 + $0x10] sm:$0xff]
  %v17 = vld [vmem:[%s0 + $0x18] sm:$0xff]
  %v18 = vld [vmem:[%s1] sm:$0xff]
  %v19 = vld [vmem:[%s1 + $0x8] sm:$0xff]
  %v20 = vld [vmem:[%s1 + $0x10] sm:$0xff]
  %v21 = vld [vmem:[%s1 + $0x18] sm:$0xff]
  %v22 = vld [vmem:[%s1 + $0x20] sm:$0xff]
  %v23 = vld [vmem:[%s1 + $0x28] sm:$0xff]
  %v24 = vld [vmem:[%s1 + $0x30] sm:$0xff]
  %v25 = vld [vmem:[%s1 + $0x38] sm:$0xff]
  %v26 = vld [vmem:[%s1 + $0x40] sm:$0xff]
  %v27 = vld [vmem:[%s1 + $0x48] sm:$0xff]
  %v28 = vld [vmem:[%s1 + $0x50] sm:$0xff]
  %v29 = vld [vmem:[%s1 + $0x58] sm:$0xff]
  %v30 = vld [vmem:[%s1 + $0x60] sm:$0xff]
  %v31 = vld [vmem:[%s1 + $0x68] sm:$0xff]
  %v32 = vld [vmem:[%s1 + $0x70] sm:$0xff]
  %v33 = vld [vmem:[%s1 + $0x78] sm:$0xff]
  %v34 = vld [vmem:[%s1 + $0x80] sm:$0xff]
  %v35 = vld [vmem:[%s1 + $0x88] sm:$0xff]
  %v36 = vld [vmem:[%s1 + $0x90] sm:$0xff]
  %v37 = vld [vmem:[%s1 + $0x98] sm:$0xff]
  %v38 = vld [vmem:[%s1 + $0xa0] sm:$0xff]
  %v39 = vld [vmem:[%s1 + $0xa8] sm:$0xff]
  %v40 = vld [vmem:[%s1 + $0xb0] sm:$0xff]
  %v41 = vld [vmem:[%s1 + $0xb8] sm:$0xff]
  %v42 = vld [vmem:[%s1 + $0xc0] sm:$0xff]
  %v43 = vld [vmem:[%s1 + $0xc8] sm:$0xff]
  %v44 = vld [vmem:[%s1 + $0xd0] sm:$0xff]
  %v45 = vld [vmem:[%s1 + $0xd8] sm:$0xff]
  %v46 = vld [vmem:[%s1 + $0xe0] sm:$0xff]
  %v47 = vld [vmem:[%s1 + $0xe8] sm:$0xff]
  %v48 = vld [vmem:[%s1 + $0xf0] sm:$0xff]
  %v49 = vld [vmem:[%s1 + $0xf8] sm:$0xff]
  %v50 = vld [vmem:[%s1 + $0x100] sm:$0xff]
  %v51 = vld [vmem:[%s1 + $0x108] sm:$0xff]
  %v52 = vld [vmem:[%s1 + $0x110] sm:$0xff]
  %v53 = vld [vmem:[%s1 + $0x118] sm:$0xff]
  %v54 = vld [vmem:[%s1 + $0x120] sm:$0x3f]
  %v55 = vld [vmem:[%s1 + $0x128] sm:$0x3f]
  %v56 = vld [vmem:[%s2] sm:$0xff]
  %v57 = vld [vmem:[%s2 + $0x8] sm:$0xff]
  %59 = vset.pattern.permute.xlu0 0
  %60 = vperm.xlu0 %59, %v56
  %v61 = vpop.permute.xlu0 %60
  %64 = vset.pattern.permute.xlu0 0
  %65 = vperm.xlu0 %64, %v57
  %v66 = vpop.permute.xlu0 %65
  %vm68 = vcmask 179200
  %v70 = vsel %vm68, %v15, 0
  %v73 = vsel %vm68, %v17, 0
  %vm75 = vcmask 1045504
  %v77 = vsel %vm75, %v54, 0
  %v80 = vsel %vm75, %v55, 0
  %82 = vmatprep.subr.mxu0 %v19
  %83 = vmatpush1.msra.mxu0 %v18
  %84 = vmatprep.subr.mxu0 %v21
  %85 = vmatpush1.msra.mxu0 %v20
  %86 = vmatprep.subr.mxu0 %v23
  %87 = vmatpush1.msra.mxu0 %v22
  %88 = vmatprep.subr.mxu0 %v25
  %89 = vmatpush1.msra.mxu0 %v24
  %90 = vmatprep.subr.mxu0 %v27
  %91 = vmatpush1.msra.mxu0 %v26
  %92 = vmatprep.subr.mxu0 %v29
  %93 = vmatpush1.msra.mxu0 %v28
  %94 = vmatprep.subr.mxu0 %v31
  %95 = vmatpush1.msra.mxu0 %v30
  %96 = vmatprep.subr.mxu0 %v33
  %97 = vmatpush1.msra.mxu0 %v32
  %98 = vmatprep.subr.mxu0 %v35
  %99 = vmatpush1.msra.mxu0 %v34
  %100 = vmatprep.subr.mxu0 %v37
  %101 = vmatpush1.msra.mxu0 %v36
  %102 = vmatprep.subr.mxu0 %v39
  %103 = vmatpush1.msra.mxu0 %v38
  %104 = vmatprep.subr.mxu0 %v41
  %105 = vmatpush1.msra.mxu0 %v40
  %106 = vmatprep.subr.mxu0 %v43
  %107 = vmatpush1.msra.mxu0 %v42
  %108 = vmatprep.subr.mxu0 %v45
  %109 = vmatpush1.msra.mxu0 %v44
  %110 = vmatprep.subr.mxu0 %v47
  %111 = vmatpush1.msra.mxu0 %v46
  %112 = vmatprep.subr.mxu0 %v49
  %113 = vmatpush1.msra.mxu0 %v48
  %114 = vmatprep.subr.mxu0 %v51
  %115 = vmatpush1.msra.mxu0 %v50
  %116 = vmatprep.subr.mxu0 %v53
  %117 = vmatpush1.msra.mxu0 %v52
  %118 = vmatprep.subr.mxu0 %v80
  %119 = vmatpush1.msra.mxu0 %v77
  %120 = vmatprep.subr.mxu0 0.0
  %121 = vmatpush1.msra.mxu0 0.0
  %122 = vmatprep.subr.mxu0 0.0
  %123 = vmatpush1.msra.mxu0 0.0
  %124 = vmatprep.subr.mxu0 0.0
  %125 = vmatpush1.msra.mxu0 0.0
  %126 = vmatprep.subr.mxu0 0.0
  %127 = vmatpush1.msra.mxu0 0.0
  %128 = vmatprep.subr.mxu0 0.0
  %129 = vmatpush1.msra.mxu0 0.0
  %130 = vmatprep.subr.mxu0 0.0
  %131 = vmatpush1.msra.mxu0 0.0
  %132 = vmatprep.subr.mxu0 0.0
  %133 = vmatpush1.msra.mxu0 0.0
  %134 = vmatprep.subr.mxu0 0.0
  %135 = vmatpush1.msra.mxu0 0.0
  %136 = vmatprep.subr.mxu0 0.0
  %137 = vmatpush1.msra.mxu0 0.0
  %138 = vmatprep.subr.mxu0 0.0
  %139 = vmatpush1.msra.mxu0 0.0
  %140 = vmatprep.subr.mxu0 0.0
  %141 = vmatpush1.msra.mxu0 0.0
  %142 = vmatprep.subr.mxu0 0.0
  %143 = vmatpush1.msra.mxu0 0.0
  %144 = vmatprep.subr.mxu0 0.0
  %145 = vmatpush1.msra.mxu0 0.0
  %146 = vmatprep.mubr.f32.mxu0 %v70
  %147 = vmatmul.mubr.f32.gmra.mrb[0].mxu0 %v14
  %v148 = vpop.f32.mrb[0].mxu0
  %v149 = vadd.f32 %v61, %v148
  %v150 = vpop.f32.mrb[0].mxu0
  %v151 = vadd.f32 %v61, %v150
  %152 = vmatprep.mubr.f32.mxu0 %v73
  %153 = vmatmul.mubr.f32.gmra.mrb[0].mxu0 %v16
  %v154 = vpop.f32.mrb[0].mxu0
  %v155 = vadd.f32 %v66, %v154
  %v156 = vpop.f32.mrb[0].mxu0
  %v157 = vadd.f32 %v66, %v156
  %158 = vdwg.mxu0
  %v159 = vmax.f32 %v149, 0.0
  %v160 = vmax.f32 %v151, 0.0
  %v161 = vmax.f32 %v155, 0.0
  %v162 = vmax.f32 %v157, 0.0
  %163 = vst [vmem:[%s3] sm:$0xff] %v159
  %vm164 = vcmask 588800
  %165 = vst.msk [vmem:[%s3 + $0x8] sm:$0xff] %vm164, %v160
  %166 = vst [vmem:[%s3 + $0x10] sm:$0xff] %v161
  %167 = vst.msk [vmem:[%s3 + $0x18] sm:$0xff] %vm164, %v162
  // Predicated region
  $region14: #{lenet_forward.4} parent=0 // pred_check
    _
  $region15: #{lenet_forward.4} parent=0 // pred_check_branch
    %169 = sbr.rel (0) target = $region17
  $region16: #{lenet_forward.4} parent=0 // pred_region
    _
  $region17: #{lenet_forward.4} parent=0 // pred_fallthru
    _
  // Predicated region
  $region18: #{lenet_forward.4} parent=0 // pred_check
    _
  $region19: #{lenet_forward.4} parent=0 // pred_check_branch
    %171 = sbr.rel (0) target = $region21
  $region20: #{lenet_forward.4} parent=0 // pred_region
    _
  $region21: #{lenet_forward.4} parent=0 // pred_fallthru
    _

// kernel: lenet_forward.5
$region0: #{lenet_forward.5}
  #allocation0 [shape = 'u32[]', space=smem, size = 0x4, offset = 0x4, fixed_abs, tag = 'smem constant byte address 0x4 - core index']
  #allocation1 [shape = 'u32[144,128]{1,0:T(1,128)}', space=vmem, size = 0x12000, scoped, tag = 'internal scratch']
  %s0 = inlined_call_operand.vmem [shape: f32[2,400], index: 0, kind: input, shape index: {}]
  %s1 = inlined_call_operand.vmem [shape: f32[400,120], index: 1, kind: input, shape index: {}]
  %s2 = inlined_call_operand.vmem [shape: f32[1,120], index: 2, kind: input, shape index: {}]
  %s3 = inlined_call_operand.vmem [shape: f32[120,84], index: 3, kind: input, shape index: {}]
  %s4 = inlined_call_operand.vmem [shape: f32[1,84], index: 4, kind: input, shape index: {}]
  %s5 = inlined_call_operand.vmem [shape: f32[84,10], index: 5, kind: input, shape index: {}]
  %s6 = inlined_call_operand.vmem [shape: f32[1,10], index: 6, kind: input, shape index: {}]
  %s7 = inlined_call_operand.hbm [shape: f32[2,10], index: 7, kind: output, shape index: {}]
  %s8 = sld [smem:[#allocation0]]
  $region38: #{lenet_forward.5} parent=0
    _
  %s10 = ssub.s32 1, %s8
  %s11 = scalar_select 0, %s10, %s8
  $region1: #{lenet_forward.5} parent=0
    #allocation2 [shape = 'u8[1024]{0}', space=vmem, size = 0x400, scoped, tag = 'output window, operand 0, single buffered']
    #allocation3 [shape = 's32[1]{0}', space=sflag, size = 0x4, scoped, tag = 'scoped memory for lenet_forward.5']
    %12 = vsyncpa [#allocation3], 0
    // Predicated region
    $region2: #{lenet_forward.5} parent=1 // pred_check
      _
    $region3: #{lenet_forward.5} parent=1 // pred_check_branch
      %14 = sbr.rel (0) target = $region5
    $region4: #{lenet_forward.5} parent=1 // pred_region
      _
    $region5: #{lenet_forward.5} parent=1 // pred_fallthru
      _
    // Predicated region
    $region6: #{lenet_forward.5} parent=1 // pred_check
      _
    $region7: #{lenet_forward.5} parent=1 // pred_check_branch
      %16 = sbr.rel (0) target = $region9
    $region8: #{lenet_forward.5} parent=1 // pred_region
      _
    $region9: #{lenet_forward.5} parent=1 // pred_fallthru
      _
    // Predicated region
    $region10: #{lenet_forward.5} parent=1 // pred_check
      _
    $region11: #{lenet_forward.5} parent=1 // pred_check_branch
      %18 = sbr.rel (0) target = $region13
    $region12: #{lenet_forward.5} parent=1 // pred_region
      _
    $region13: #{lenet_forward.5} parent=1 // pred_fallthru
      _
    // Predicated region
    $region14: #{lenet_forward.5} parent=1 // pred_check
      _
    $region15: #{lenet_forward.5} parent=1 // pred_check_branch
      %20 = sbr.rel (0) target = $region17
    $region16: #{lenet_forward.5} parent=1 // pred_region
      _
    $region17: #{lenet_forward.5} parent=1 // pred_fallthru
      _
    // Predicated region
    $region18: #{lenet_forward.5} parent=1 // pred_check
      _
    $region19: #{lenet_forward.5} parent=1 // pred_check_branch
      %22 = sbr.rel (0) target = $region21
    $region20: #{lenet_forward.5} parent=1 // pred_region
      _
    $region21: #{lenet_forward.5} parent=1 // pred_fallthru
      _
    // Predicated region
    $region22: #{lenet_forward.5} parent=1 // pred_check
      _
    $region23: #{lenet_forward.5} parent=1 // pred_check_branch
      %24 = sbr.rel (0) target = $region25
    $region24: #{lenet_forward.5} parent=1 // pred_region
      _
    $region25: #{lenet_forward.5} parent=1 // pred_fallthru
      _
    // Predicated region
    $region26: #{lenet_forward.5} parent=1 // pred_check
      _
    $region27: #{lenet_forward.5} parent=1 // pred_check_branch
      %26 = sbr.rel (0) target = $region29
    $region28: #{lenet_forward.5} parent=1 // pred_region
      _
    $region29: #{lenet_forward.5} parent=1 // pred_fallthru
      _
    %v27 = vld [vmem:[%s0] sm:$0xff]
    %v28 = vld [vmem:[%s1] sm:$0xff]
    %v29 = vld [vmem:[%s1 + $0x8] sm:$0xff]
    %v30 = vld [vmem:[%s1 + $0x10] sm:$0xff]
    %v31 = vld [vmem:[%s1 + $0x18] sm:$0xff]
    %v32 = vld [vmem:[%s1 + $0x20] sm:$0xff]
    %v33 = vld [vmem:[%s1 + $0x28] sm:$0xff]
    %v34 = vld [vmem:[%s1 + $0x30] sm:$0xff]
    %v35 = vld [vmem:[%s1 + $0x38] sm:$0xff]
    %v36 = vld [vmem:[%s1 + $0x40] sm:$0xff]
    %v37 = vld [vmem:[%s1 + $0x48] sm:$0xff]
    %v38 = vld [vmem:[%s1 + $0x50] sm:$0xff]
    %v39 = vld [vmem:[%s1 + $0x58] sm:$0xff]
    %v40 = vld [vmem:[%s1 + $0x60] sm:$0xff]
    %v41 = vld [vmem:[%s1 + $0x68] sm:$0xff]
    %v42 = vld [vmem:[%s1 + $0x70] sm:$0xff]
    %v43 = vld [vmem:[%s1 + $0x78] sm:$0xff]
    %v44 = vld [vmem:[%s1 + $0x80] sm:$0xff]
    %v45 = vld [vmem:[%s1 + $0x88] sm:$0xff]
    %v46 = vld [vmem:[%s1 + $0x90] sm:$0xff]
    %v47 = vld [vmem:[%s1 + $0x98] sm:$0xff]
    %v48 = vld [vmem:[%s1 + $0xa0] sm:$0xff]
    %v49 = vld [vmem:[%s1 + $0xa8] sm:$0xff]
    %v50 = vld [vmem:[%s1 + $0xb0] sm:$0xff]
    %v51 = vld [vmem:[%s1 + $0xb8] sm:$0xff]
    %v52 = vld [vmem:[%s1 + $0xc0] sm:$0xff]
    %v53 = vld [vmem:[%s1 + $0xc8] sm:$0xff]
    %v54 = vld [vmem:[%s1 + $0xd0] sm:$0xff]
    %v55 = vld [vmem:[%s1 + $0xd8] sm:$0xff]
    %v56 = vld [vmem:[%s1 + $0xe0] sm:$0xff]
    %v57 = vld [vmem:[%s1 + $0xe8] sm:$0xff]
    %v58 = vld [vmem:[%s1 + $0xf0] sm:$0xff]
    %v59 = vld [vmem:[%s1 + $0xf8] sm:$0xff]
    %v60 = vld [vmem:[%s1 + $0x100] sm:$0xff]
    %v61 = vld [vmem:[%s1 + $0x108] sm:$0xff]
    %v62 = vld [vmem:[%s1 + $0x110] sm:$0xff]
    %v63 = vld [vmem:[%s1 + $0x118] sm:$0xff]
    %v64 = vld [vmem:[%s1 + $0x120] sm:$0xff]
    %v65 = vld [vmem:[%s1 + $0x128] sm:$0xff]
    %v66 = vld [vmem:[%s1 + $0x130] sm:$0xff]
    %v67 = vld [vmem:[%s1 + $0x138] sm:$0xff]
    %v68 = vld [vmem:[%s1 + $0x140] sm:$0xff]
    %v69 = vld [vmem:[%s1 + $0x148] sm:$0xff]
    %v70 = vld [vmem:[%s1 + $0x150] sm:$0xff]
    %v71 = vld [vmem:[%s1 + $0x158] sm:$0xff]
    %v72 = vld [vmem:[%s1 + $0x160] sm:$0xff]
    %v73 = vld [vmem:[%s1 + $0x168] sm:$0xff]
    %v74 = vld [vmem:[%s1 + $0x170] sm:$0xff]
    %v75 = vld [vmem:[%s1 + $0x178] sm:$0xff]
    %v76 = vld [vmem:[%s1 + $0x180] sm:$0xff]
    %v77 = vld [vmem:[%s1 + $0x188] sm:$0xff]
    %v78 = vld [vmem:[%s2] sm:$0x1]
    %v80 = vlaneseq
    %v81 = vshrl.u32 %v80, 7
    %v82 = vsub.s32 0, %v81
    %v83 = vrot.slane %v78, %v82
    %v86 = vcombine.high %v27, %v27
    %v88 = vunpack.c.l.s4 1983009808
    %v89 = vunpack.c.0.s8 %v88
    %v90 = vlaneseq
    %v91 = vshrl.u32 %v90, 7
    %v92 = vsub.s32 %v89, %v91
    %v93 = vrot.slane %v27, %v92
    %v95 = vunpack.c.l.s4 1983009808
    %v96 = vunpack.c.0.s8 %v95
    %v97 = vlaneseq
    %v98 = vshrl.u32 %v97, 7
    %v99 = vsub.s32 %v96, %v98
    %v100 = vrot.slane %v86, %v99
    %v101 = vcombine.high %v93, %v93
    %v102 = vcombine.high %v100, %v100
    %vm106 = vcmask 130048
    %v107 = vsel %vm106, %v102, 0
    %109 = vmatprep.subr.mxu0 0.0
    %110 = vmatpush1.msra.mxu0 %v28
    %111 = vmatprep.subr.mxu0 0.0
    %112 = vmatpush1.msra.mxu0 %v29
    %113 = vmatprep.subr.mxu0 0.0
    %114 = vmatpush1.msra.mxu0 %v30
    %115 = vmatprep.subr.mxu0 0.0
    %116 = vmatpush1.msra.mxu0 %v31
    %117 = vmatprep.subr.mxu0 0.0
    %118 = vmatpush1.msra.mxu0 %v32
    %119 = vmatprep.subr.mxu0 0.0
    %120 = vmatpush1.msra.mxu0 %v33
    %121 = vmatprep.subr.mxu0 0.0
    %122 = vmatpush1.msra.mxu0 %v34
    %123 = vmatprep.subr.mxu0 0.0
    %124 = vmatpush1.msra.mxu0 %v35
    %125 = vmatprep.subr.mxu0 0.0
    %126 = vmatpush1.msra.mxu0 %v36
    %127 = vmatprep.subr.mxu0 0.0
    %128 = vmatpush1.msra.mxu0 %v37
    %129 = vmatprep.subr.mxu0 0.0
    %130 = vmatpush1.msra.mxu0 %v38
    %131 = vmatprep.subr.mxu0 0.0
    %132 = vmatpush1.msra.mxu0 %v39
    %133 = vmatprep.subr.mxu0 0.0
    %134 = vmatpush1.msra.mxu0 %v40
    %135 = vmatprep.subr.mxu0 0.0
    %136 = vmatpush1.msra.mxu0 %v41
    %137 = vmatprep.subr.mxu0 0.0
    %138 = vmatpush1.msra.mxu0 %v42
    %139 = vmatprep.subr.mxu0 0.0
    %140 = vmatpush1.msra.mxu0 %v43
    %141 = vmatprep.subr.mxu0 0.0
    %142 = vmatpush1.msra.mxu0 %v44
    %143 = vmatprep.subr.mxu0 0.0
    %144 = vmatpush1.msra.mxu0 %v45
    %145 = vmatprep.subr.mxu0 0.0
    %146 = vmatpush1.msra.mxu0 %v46
    %147 = vmatprep.subr.mxu0 0.0
    %148 = vmatpush1.msra.mxu0 %v47
    %149 = vmatprep.subr.mxu0 0.0
    %150 = vmatpush1.msra.mxu0 %v48
    %151 = vmatprep.subr.mxu0 0.0
    %152 = vmatpush1.msra.mxu0 %v49
    %153 = vmatprep.subr.mxu0 0.0
    %154 = vmatpush1.msra.mxu0 %v50
    %155 = vmatprep.subr.mxu0 0.0
    %156 = vmatpush1.msra.mxu0 %v51
    %157 = vmatprep.subr.mxu0 0.0
    %158 = vmatpush1.msra.mxu0 %v52
    %159 = vmatprep.subr.mxu0 0.0
    %160 = vmatpush1.msra.mxu0 %v53
    %161 = vmatprep.subr.mxu0 0.0
    %162 = vmatpush1.msra.mxu0 %v54
    %163 = vmatprep.subr.mxu0 0.0
    %164 = vmatpush1.msra.mxu0 %v55
    %165 = vmatprep.subr.mxu0 0.0
    %166 = vmatpush1.msra.mxu0 %v56
    %167 = vmatprep.subr.mxu0 0.0
    %168 = vmatpush1.msra.mxu0 %v57
    %169 = vmatprep.subr.mxu0 0.0
    %170 = vmatpush1.msra.mxu0 %v58
    %171 = vmatprep.subr.mxu0 0.0
    %172 = vmatpush1.msra.mxu0 %v59
    %173 = vmatprep.mubr.f32.mxu0 %v101
    %174 = vmatmul.mubr.f32.gmra.mrb[0].mxu0 %v93
    %v175 = vpop.f32.mrb[0].mxu0
    %v176 = vadd.f32 %v83, %v175
    %v177 = vpop.f32.mrb[0].mxu0
    %178 = vdwg.mxu0
    %179 = vmatprep.subr.mxu0 0.0
    %180 = vmatpush1.msra.mxu0 %v60
    %181 = vmatprep.subr.mxu0 0.0
    %182 = vmatpush1.msra.mxu0 %v61
    %183 = vmatprep.subr.mxu0 0.0
    %184 = vmatpush1.msra.mxu0 %v62
    %185 = vmatprep.subr.mxu0 0.0
    %186 = vmatpush1.msra.mxu0 %v63
    %187 = vmatprep.subr.mxu0 0.0
    %188 = vmatpush1.msra.mxu0 %v64
    %189 = vmatprep.subr.mxu0 0.0
    %190 = vmatpush1.msra.mxu0 %v65
    %191 = vmatprep.subr.mxu0 0.0
    %192 = vmatpush1.msra.mxu0 %v66
    %193 = vmatprep.subr.mxu0 0.0
    %194 = vmatpush1.msra.mxu0 %v67
    %195 = vmatprep.subr.mxu0 0.0
    %196 = vmatpush1.msra.mxu0 %v68
    %197 = vmatprep.subr.mxu0 0.0
    %198 = vmatpush1.msra.mxu0 %v69
    %199 = vmatprep.subr.mxu0 0.0
    %200 = vmatpush1.msra.mxu0 %v70
    %201 = vmatprep.subr.mxu0 0.0
    %202 = vmatpush1.msra.mxu0 %v71
    %203 = vmatprep.subr.mxu0 0.0
    %204 = vmatpush1.msra.mxu0 %v72
    %205 = vmatprep.subr.mxu0 0.0
    %206 = vmatpush1.msra.mxu0 %v73
    %207 = vmatprep.subr.mxu0 0.0
    %208 = vmatpush1.msra.mxu0 %v74
    %209 = vmatprep.subr.mxu0 0.0
    %210 = vmatpush1.msra.mxu0 %v75
    %211 = vmatprep.subr.mxu0 0.0
    %212 = vmatpush1.msra.mxu0 %v76
    %213 = vmatprep.subr.mxu0 0.0
    %214 = vmatpush1.msra.mxu0 %v77
    %215 = vmatprep.subr.mxu0 0.0
    %216 = vmatpush1.msra.mxu0 0.0
    %217 = vmatprep.subr.mxu0 0.0
    %218 = vmatpush1.msra.mxu0 0.0
    %219 = vmatprep.subr.mxu0 0.0
    %220 = vmatpush1.msra.mxu0 0.0
    %221 = vmatprep.subr.mxu0 0.0
    %222 = vmatpush1.msra.mxu0 0.0
    %223 = vmatprep.subr.mxu0 0.0
    %224 = vmatpush1.msra.mxu0 0.0
    %225 = vmatprep.subr.mxu0 0.0
    %226 = vmatpush1.msra.mxu0 0.0
    %227 = vmatprep.subr.mxu0 0.0
    %228 = vmatpush1.msra.mxu0 0.0
    %229 = vmatprep.subr.mxu0 0.0
    %230 = vmatpush1.msra.mxu0 0.0
    %231 = vmatprep.subr.mxu0 0.0
    %232 = vmatpush1.msra.mxu0 0.0
    %233 = vmatprep.subr.mxu0 0.0
    %234 = vmatpush1.msra.mxu0 0.0
    %235 = vmatprep.subr.mxu0 0.0
    %236 = vmatpush1.msra.mxu0 0.0
    %237 = vmatprep.subr.mxu0 0.0
    %238 = vmatpush1.msra.mxu0 0.0
    %239 = vmatprep.subr.mxu0 0.0
    %240 = vmatpush1.msra.mxu0 0.0
    %241 = vmatprep.subr.mxu0 0.0
    %242 = vmatpush1.msra.mxu0 0.0
    %243 = vmatprep.mubr.f32.mxu0 %v107
    %244 = vmatmul.mubr.f32.gmra.mrb[0].mxu0 %v100
    %v245 = vpop.f32.mrb[0].mxu0
    %v246 = vadd.f32 %v176, %v245
    %v247 = vpop.f32.mrb[0].mxu0
    %248 = vdwg.mxu0
    %v249 = vmax.f32 %v246, 0.0
    %v250 = vld [vmem:[%s3] sm:$0xff]
    %v251 = vld [vmem:[%s3 + $0x8] sm:$0xff]
    %v252 = vld [vmem:[%s3 + $0x10] sm:$0xff]
    %v253 = vld [vmem:[%s3 + $0x18] sm:$0xff]
    %v254 = vld [vmem:[%s3 + $0x20] sm:$0xff]
    %v255 = vld [vmem:[%s3 + $0x28] sm:$0xff]
    %v256 = vld [vmem:[%s3 + $0x30] sm:$0xff]
    %v257 = vld [vmem:[%s3 + $0x38] sm:$0xff]
    %v258 = vld [vmem:[%s3 + $0x40] sm:$0xff]
    %v259 = vld [vmem:[%s3 + $0x48] sm:$0xff]
    %v260 = vld [vmem:[%s3 + $0x50] sm:$0xff]
    %v261 = vld [vmem:[%s3 + $0x58] sm:$0xff]
    %v262 = vld [vmem:[%s3 + $0x60] sm:$0xff]
    %v263 = vld [vmem:[%s3 + $0x68] sm:$0xff]
    %v264 = vld [vmem:[%s3 + $0x70] sm:$0xff]
    %v265 = vld [vmem:[%s4] sm:$0x1]
    %v267 = vlaneseq
    %v268 = vshrl.u32 %v267, 7
    %v269 = vsub.s32 0, %v268
    %v270 = vrot.slane %v265, %v269
    %vm272 = vcmask 982016
    %v274 = vsel %vm272, %v249, 0
    %276 = vmatprep.subr.mxu0 0.0
    %277 = vmatpush1.msra.mxu0 %v250
    %278 = vmatprep.subr.mxu0 0.0
    %279 = vmatpush1.msra.mxu0 %v251
    %280 = vmatprep.subr.mxu0 0.0
    %281 = vmatpush1.msra.mxu0 %v252
    %282 = vmatprep.subr.mxu0 0.0
    %283 = vmatpush1.msra.mxu0 %v253
    %284 = vmatprep.subr.mxu0 0.0
    %285 = vmatpush1.msra.mxu0 %v254
    %286 = vmatprep.subr.mxu0 0.0
    %287 = vmatpush1.msra.mxu0 %v255
    %288 = vmatprep.subr.mxu0 0.0
    %289 = vmatpush1.msra.mxu0 %v256
    %290 = vmatprep.subr.mxu0 0.0
    %291 = vmatpush1.msra.mxu0 %v257
    %292 = vmatprep.subr.mxu0 0.0
    %293 = vmatpush1.msra.mxu0 %v258
    %294 = vmatprep.subr.mxu0 0.0
    %295 = vmatpush1.msra.mxu0 %v259
    %296 = vmatprep.subr.mxu0 0.0
    %297 = vmatpush1.msra.mxu0 %v260
    %298 = vmatprep.subr.mxu0 0.0
    %299 = vmatpush1.msra.mxu0 %v261
    %300 = vmatprep.subr.mxu0 0.0
    %301 = vmatpush1.msra.mxu0 %v262
    %302 = vmatprep.subr.mxu0 0.0
    %303 = vmatpush1.msra.mxu0 %v263
    %304 = vmatprep.subr.mxu0 0.0
    %305 = vmatpush1.msra.mxu0 %v264
    %306 = vmatprep.subr.mxu0 0.0
    %307 = vmatpush1.msra.mxu0 0.0
    %308 = vmatprep.subr.mxu0 0.0
    %309 = vmatpush1.msra.mxu0 0.0
    %310 = vmatprep.subr.mxu0 0.0
    %311 = vmatpush1.msra.mxu0 0.0
    %312 = vmatprep.subr.mxu0 0.0
    %313 = vmatpush1.msra.mxu0 0.0
    %314 = vmatprep.subr.mxu0 0.0
    %315 = vmatpush1.msra.mxu0 0.0
    %316 = vmatprep.subr.mxu0 0.0
    %317 = vmatpush1.msra.mxu0 0.0
    %318 = vmatprep.subr.mxu0 0.0
    %319 = vmatpush1.msra.mxu0 0.0
    %320 = vmatprep.subr.mxu0 0.0
    %321 = vmatpush1.msra.mxu0 0.0
    %322 = vmatprep.subr.mxu0 0.0
    %323 = vmatpush1.msra.mxu0 0.0
    %324 = vmatprep.subr.mxu0 0.0
    %325 = vmatpush1.msra.mxu0 0.0
    %326 = vmatprep.subr.mxu0 0.0
    %327 = vmatpush1.msra.mxu0 0.0
    %328 = vmatprep.subr.mxu0 0.0
    %329 = vmatpush1.msra.mxu0 0.0
    %330 = vmatprep.subr.mxu0 0.0
    %331 = vmatpush1.msra.mxu0 0.0
    %332 = vmatprep.subr.mxu0 0.0
    %333 = vmatpush1.msra.mxu0 0.0
    %334 = vmatprep.subr.mxu0 0.0
    %335 = vmatpush1.msra.mxu0 0.0
    %336 = vmatprep.subr.mxu0 0.0
    %337 = vmatpush1.msra.mxu0 0.0
    %338 = vmatprep.subr.mxu0 0.0
    %339 = vmatpush1.msra.mxu0 0.0
    %340 = vmatprep.mubr.f32.mxu0 0.0
    %341 = vmatmul.mubr.f32.gmra.mrb[0].mxu0 %v274
    %v342 = vpop.f32.mrb[0].mxu0
    %v343 = vadd.f32 %v270, %v342
    %v344 = vpop.f32.mrb[0].mxu0
    %345 = vdwg.mxu0
    %v346 = vmax.f32 %v343, 0.0
    %v347 = vld [vmem:[%s5] sm:$0xff]
    %v348 = vld [vmem:[%s5 + $0x8] sm:$0xff]
    %v349 = vld [vmem:[%s5 + $0x10] sm:$0xff]
    %v350 = vld [vmem:[%s5 + $0x18] sm:$0xff]
    %v351 = vld [vmem:[%s5 + $0x20] sm:$0xff]
    %v352 = vld [vmem:[%s5 + $0x28] sm:$0xff]
    %v353 = vld [vmem:[%s5 + $0x30] sm:$0xff]
    %v354 = vld [vmem:[%s5 + $0x38] sm:$0xff]
    %v355 = vld [vmem:[%s5 + $0x40] sm:$0xff]
    %v356 = vld [vmem:[%s5 + $0x48] sm:$0xff]
    %v357 = vld [vmem:[%s5 + $0x50] sm:$0xf]
    %v358 = vld [vmem:[%s6] sm:$0x1]
    %v360 = vlaneseq
    %v361 = vshrl.u32 %v360, 7
    %v362 = vsub.s32 0, %v361
    %v363 = vrot.slane %v358, %v362
    %vm365 = vcmask 687104
    %v367 = vsel %vm365, %v346, 0
    %vm369 = vcmask 1043456
    %v371 = vsel %vm369, %v357, 0
    %373 = vmatprep.subr.mxu0 0.0
    %374 = vmatpush1.msra.mxu0 %v347
    %375 = vmatprep.subr.mxu0 0.0
    %376 = vmatpush1.msra.mxu0 %v348
    %377 = vmatprep.subr.mxu0 0.0
    %378 = vmatpush1.msra.mxu0 %v349
    %379 = vmatprep.subr.mxu0 0.0
    %380 = vmatpush1.msra.mxu0 %v350
    %381 = vmatprep.subr.mxu0 0.0
    %382 = vmatpush1.msra.mxu0 %v351
    %383 = vmatprep.subr.mxu0 0.0
    %384 = vmatpush1.msra.mxu0 %v352
    %385 = vmatprep.subr.mxu0 0.0
    %386 = vmatpush1.msra.mxu0 %v353
    %387 = vmatprep.subr.mxu0 0.0
    %388 = vmatpush1.msra.mxu0 %v354
    %389 = vmatprep.subr.mxu0 0.0
    %390 = vmatpush1.msra.mxu0 %v355
    %391 = vmatprep.subr.mxu0 0.0
    %392 = vmatpush1.msra.mxu0 %v356
    %393 = vmatprep.subr.mxu0 0.0
    %394 = vmatpush1.msra.mxu0 %v371
    %395 = vmatprep.subr.mxu0 0.0
    %396 = vmatpush1.msra.mxu0 0.0
    %397 = vmatprep.subr.mxu0 0.0
    %398 = vmatpush1.msra.mxu0 0.0
    %399 = vmatprep.subr.mxu0 0.0
    %400 = vmatpush1.msra.mxu0 0.0
    %401 = vmatprep.subr.mxu0 0.0
    %402 = vmatpush1.msra.mxu0 0.0
    %403 = vmatprep.subr.mxu0 0.0
    %404 = vmatpush1.msra.mxu0 0.0
    %405 = vmatprep.subr.mxu0 0.0
    %406 = vmatpush1.msra.mxu0 0.0
    %407 = vmatprep.subr.mxu0 0.0
    %408 = vmatpush1.msra.mxu0 0.0
    %409 = vmatprep.subr.mxu0 0.0
    %410 = vmatpush1.msra.mxu0 0.0
    %411 = vmatprep.subr.mxu0 0.0
    %412 = vmatpush1.msra.mxu0 0.0
    %413 = vmatprep.subr.mxu0 0.0
    %414 = vmatpush1.msra.mxu0 0.0
    %415 = vmatprep.subr.mxu0 0.0
    %416 = vmatpush1.msra.mxu0 0.0
    %417 = vmatprep.subr.mxu0 0.0
    %418 = vmatpush1.msra.mxu0 0.0
    %419 = vmatprep.subr.mxu0 0.0
    %420 = vmatpush1.msra.mxu0 0.0
    %421 = vmatprep.subr.mxu0 0.0
    %422 = vmatpush1.msra.mxu0 0.0
    %423 = vmatprep.subr.mxu0 0.0
    %424 = vmatpush1.msra.mxu0 0.0
    %425 = vmatprep.subr.mxu0 0.0
    %426 = vmatpush1.msra.mxu0 0.0
    %427 = vmatprep.subr.mxu0 0.0
    %428 = vmatpush1.msra.mxu0 0.0
    %429 = vmatprep.subr.mxu0 0.0
    %430 = vmatpush1.msra.mxu0 0.0
    %431 = vmatprep.subr.mxu0 0.0
    %432 = vmatpush1.msra.mxu0 0.0
    %433 = vmatprep.subr.mxu0 0.0
    %434 = vmatpush1.msra.mxu0 0.0
    %435 = vmatprep.subr.mxu0 0.0
    %436 = vmatpush1.msra.mxu0 0.0
    %437 = vmatprep.mubr.f32.mxu0 0.0
    %438 = vmatmul.mubr.f32.gmra.mrb[0].mxu0 %v367
    %v439 = vpop.f32.mrb[0].mxu0
    %v440 = vadd.f32 %v363, %v439
    %v441 = vpop.f32.mrb[0].mxu0
    %442 = vdwg.mxu0
    %vm443 = vcmask 74752
    %444 = vst.msk [vmem:[#allocation2] sm:$0x3] %vm443, %v440
    // Predicated region
    $region30: #{lenet_forward.5} parent=1 // pred_check
      _
    $region31: #{lenet_forward.5} parent=1 // pred_check_branch
      %446 = sbr.rel (0) target = $region33
    $region32: #{lenet_forward.5} parent=1 // pred_region
      %s448 = ssub.s32 32, 32
      %449 = vsyncadd [#allocation3], %s448
      %s451 = sshll.u32 [#allocation2], 4
      %s452 = int_to_ptr.vmem [resolvable:$true] %s451
      %454 = dma.vmem_to_hbm [thread:$0]  %s452, 32, %s7, [#allocation3]
    $region33: #{lenet_forward.5} parent=1 // pred_fallthru
      _
    // Predicated region
    $region34: #{lenet_forward.5} parent=1 // pred_check
      _
    $region35: #{lenet_forward.5} parent=1 // pred_check_branch
      %456 = sbr.rel (0) target = $region37
    $region36: #{lenet_forward.5} parent=1 // pred_region
      %457 = dma.done [#allocation3], 32
    $region37: #{lenet_forward.5} parent=1 // pred_fallthru
      _
    %458 = vsyncpa [#allocation3], 1

</llo_original>
